<compile_context>
chip_gen: v7x
topology: tpu7x:2x2x1
jax: 0.10.0
libtpu: 0.0.40
codegen_flags: <defaults>
</compile_context>

<pallas_src>
import jax
import jax.numpy as jnp
from jax.experimental import pallas as pl
from jax.experimental.pallas import tpu as pltpu


def _fused_lstm_kernel(gx_ref, wh_ref, wp_ref, h_out_ref):
    """All H cells fused; state is (B_pad, H*OUT) = full 128-lane vregs.

    gx_ref : (n, B_pad, 4*H*OUT) f32  precomputed x@Wx + b, gate-major columns
    wh_ref : (H*OUT, 4*H*OUT)   bf16  hidden->gates, block-diagonal per cell
    wp_ref : (3, H*OUT)         f32   peephole weights (rows: i, f, o)
    h_out_ref: (B_pad, H*OUT)   f32   final hidden state of every cell
    """
    n_steps = gx_ref.shape[0]
    Bp, HO = h_out_ref.shape

    wh = wh_ref[...]                                   # bf16 (HO, 4*HO)
    wp = wp_ref[...].astype(jnp.float32)               # (3, HO)

    # Hoist broadcasts out of the loop (JAX does not CSE broadcast_in_dim).
    # i/f peepholes both read the OLD c -> fuse into one (Bp, 2*HO) slab.
    wp_if = jnp.concatenate(
        [jnp.broadcast_to(wp[0:1, :], (Bp, HO)),
         jnp.broadcast_to(wp[1:2, :], (Bp, HO))], axis=-1)
    wp_o = jnp.broadcast_to(wp[2:3, :], (Bp, HO))

    h = jnp.zeros((Bp, HO), jnp.float32)
    c = jnp.zeros((Bp, HO), jnp.float32)

    # n_steps is a small compile-time constant -> static unroll is fine.  The
    # RHS of the recurrent matmul is loop-invariant; see header note on
    # keeping it resident in the MXU.
    for t in range(n_steps):
        # gx_ref[t]: (Bp, 4*HO) vreg-aligned slab (time on the leading axis).
        g = gx_ref[t] + jnp.dot(h.astype(jnp.bfloat16), wh,
                                preferred_element_type=jnp.float32)
        # Gate-major columns: [ i | f | c~ | o ], each HO lanes wide.
        if_act = jax.nn.sigmoid(
            g[:, :2 * HO] + wp_if * jnp.concatenate([c, c], axis=-1))
        i_g = if_act[:, :HO]
        f_g = if_act[:, HO:]
        c = f_g * c + i_g * jnp.tanh(g[:, 2 * HO:3 * HO])
        o_g = jax.nn.sigmoid(g[:, 3 * HO:] + wp_o * c)   # o-gate peeps at NEW c
        h = o_g * jnp.tanh(c)

    h_out_ref[...] = h.astype(h_out_ref.dtype)


def _fuse_params(params):
    """Pack per-cell params into lane-dense, gate-major fused layouts."""
    wx, wh, wp, b = params
    H, XM, G4 = wx.shape
    OUT = G4 // 4
    HO = H * OUT

    # wx: (H, XM, 4*OUT) -> (XM, 4*H*OUT), columns ordered [gate, cell, out].
    wx_f = jnp.transpose(wx.reshape(H, XM, 4, OUT), (1, 2, 0, 3)).reshape(XM, 4 * HO)

    # wh: (H, OUT, 4*OUT) -> block-diagonal (H*OUT, 4*H*OUT), gate-major cols.
    # Stored bf16: halves the HBM->VMEM DMA and hits the bf16-native MXU.
    eye = jnp.eye(H, dtype=wh.dtype)
    wh_f = jnp.einsum('kigj,kl->kiglj', wh.reshape(H, OUT, 4, OUT), eye)
    wh_f = wh_f.reshape(HO, 4 * HO).astype(jnp.bfloat16)

    # wp: (H, 3, OUT) -> (3, H*OUT)  (lane order [cell, out], matching h/c).
    wp_f = jnp.transpose(wp, (1, 0, 2)).reshape(3, HO)

    # b: (H, 1, 4*OUT) -> (1, 4*H*OUT), gate-major.
    b_f = jnp.transpose(b.reshape(H, 4, OUT), (1, 0, 2)).reshape(1, 4 * HO)

    return wx_f, wh_f, wp_f, b_f


def time_lstm_layer_forward(x, n, params):
    """Pallas TimeLSTMLayer forward.

    x: [batch, seq, xm]  (seq >= n)
    n: number of time steps to run (static int)
    params: (wx, wh, wp, b) stacked per-cell parameters
    returns: [batch, hidden_neuron_size, out_feature_num]
    """
    wx, wh, wp, b = params
    H = wx.shape[0]                 # hidden_neuron_size
    B = x.shape[0]
    OUT = wh.shape[1]
    HO = H * OUT

    wx_f, wh_f, wp_f, b_f = _fuse_params(params)

    # Input projection hoisted out of the recurrence AND out of the kernel:
    # removes the lane-sparse XM=4 path (4/128 lane use, 4-deep contraction)
    # and the second MXU weight configuration from the kernel.
    x_t = jnp.transpose(x[:, :n, :], (1, 0, 2)).astype(jnp.float32)   # (n, B, XM)
    gx = jnp.einsum('tbx,xg->tbg', x_t, wx_f.astype(jnp.float32)) + b_f  # (n,B,4HO)

    # Pad batch to the 8-sublane vreg height so every per-step read/compute is
    # full-vreg aligned.  Padding rows never mix with real rows (the recurrent
    # matmul only contracts over the lane axis), so they are simply discarded.
    B_pad = max(8, -(-B // 8) * 8)
    gx = jnp.pad(gx, ((0, 0), (0, B_pad - B), (0, 0)))

    out = pl.pallas_call(
        _fused_lstm_kernel,
        out_shape=jax.ShapeDtypeStruct((B_pad, HO), jnp.float32),
        in_specs=[
            pl.BlockSpec(memory_space=pltpu.MemorySpace.VMEM),   # gx
            pl.BlockSpec(memory_space=pltpu.MemorySpace.VMEM),   # wh (bf16)
            pl.BlockSpec(memory_space=pltpu.MemorySpace.VMEM),   # wp
        ],
        out_specs=pl.BlockSpec(memory_space=pltpu.MemorySpace.VMEM),
        # Single serial recurrence -> no grid: no per-grid-step overhead and no
        # double-buffering of the loop-invariant weights.
        # TODO(synk): if multiple independent sequences/replicas exist, add a
        # leading "parallel" grid axis so v7x's second TensorCore is used.
    )(gx, wh_f, wp_f)

    # (B_pad, H*OUT) -> (B, H, OUT): slice + free row-major reshape.
    return out[:B].reshape(B, H, OUT).astype(x.dtype)


def reference_forward(x, n, params):
    """Pure-JAX f32 reference mirroring the PyTorch per-cell loop structure."""
    wx, wh, wp, b = params
    H = wx.shape[0]
    B = x.shape[0]
    OUT = wh.shape[1]
    outs = []
    for k in range(H):
        h = jnp.zeros((B, OUT), jnp.float32)
        c = jnp.zeros((B, OUT), jnp.float32)
        for t in range(n):
            g = x[:, t, :] @ wx[k] + h @ wh[k] + b[k]
            i_g = jax.nn.sigmoid(g[:, :OUT] + wp[k, 0] * c)
            f_g = jax.nn.sigmoid(g[:, OUT:2 * OUT] + wp[k, 1] * c)
            c = f_g * c + i_g * jnp.tanh(g[:, 2 * OUT:3 * OUT])
            o_g = jax.nn.sigmoid(g[:, 3 * OUT:] + wp[k, 2] * c)
            h = o_g * jnp.tanh(c)
        outs.append(h)
    return jnp.stack(outs, axis=1)


def init_params(key, hidden_neuron_size, nn_in_feature_num, nn_out_feature_num):
    """Deterministic randn-style init (NN_INIT_TYPE_RANDN analog)."""
    H, XM, OUT = hidden_neuron_size, nn_in_feature_num, nn_out_feature_num
    k1, k2, k3, k4 = jax.random.split(key, 4)
    scale = 0.1
    wx = scale * jax.random.normal(k1, (H, XM, 4 * OUT), jnp.float32)
    wh = scale * jax.random.normal(k2, (H, OUT, 4 * OUT), jnp.float32)
    wp = scale * jax.random.normal(k3, (H, 3, OUT), jnp.float32)
    b = scale * jax.random.normal(k4, (H, 1, 4 * OUT), jnp.float32)
    return wx, wh, wp, b


if __name__ == "__main__":
    # hidden_neuron_size=4, nn_in_feature_num=4, nn_out_feature_num=32
    # x: [batch=2, n=8, xm=4]  ->  fused state width H*OUT = 128 lanes.
    BATCH, SEQ, XM = 2, 8, 4
    HIDDEN_NEURON_SIZE, OUT = 4, 32
    N_STEPS = SEQ

    key = jax.random.PRNGKey(0)
    kx, kp = jax.random.split(key)
    x = jax.random.normal(kx, (BATCH, SEQ, XM), jnp.float32)
    params = init_params(kp, HIDDEN_NEURON_SIZE, XM, OUT)

    out = time_lstm_layer_forward(x, N_STEPS, params)
    out = jax.block_until_ready(out)

    ref = reference_forward(x, N_STEPS, params)
    assert out.shape == (BATCH, HIDDEN_NEURON_SIZE, OUT), out.shape
    # Recurrent matmul operands are bf16 (f32 accumulation) -> loosen the
    # all-f32 reference tolerance from 1e-4 to 1e-2.
    assert jnp.allclose(out, ref, atol=1e-2, rtol=1e-2), "mismatch vs reference"

    print("KERNEL_OK")
</pallas_src>

<mosaic_0001>
module attributes {stable_mosaic.version = 11 : i64} {
  func.func @_fused_lstm_kernel(%arg0: memref<8x8x512xf32, #tpu.memory_space<vmem>>, %arg1: memref<128x512xbf16, #tpu.memory_space<vmem>>, %arg2: memref<3x128xf32, #tpu.memory_space<vmem>>, %arg3: memref<8x128xf32, #tpu.memory_space<vmem>>) attributes {dimension_semantics = [], scalar_prefetch = 0 : i64, scratch_operands = 0 : i64, tpu.core_type = #tpu.core_type<tc>} {
    %c0 = arith.constant 0 : index
    %c0_0 = arith.constant 0 : index
    %0 = vector.load %arg1[%c0, %c0_0] : memref<128x512xbf16, #tpu.memory_space<vmem>>, vector<128x512xbf16>
    %c0_1 = arith.constant 0 : index
    %c0_2 = arith.constant 0 : index
    %1 = vector.load %arg2[%c0_1, %c0_2] : memref<3x128xf32, #tpu.memory_space<vmem>>, vector<3x128xf32>
    %2 = vector.extract_strided_slice %1 {offsets = [0, 0], sizes = [1, 128], strides = [1, 1]} : vector<3x128xf32> to vector<1x128xf32>
    %3 = vector.shape_cast %2 : vector<1x128xf32> to vector<1x128xf32>
    %4 = vector.broadcast %3 : vector<1x128xf32> to vector<8x128xf32>
    %5 = vector.extract_strided_slice %1 {offsets = [1, 0], sizes = [1, 128], strides = [1, 1]} : vector<3x128xf32> to vector<1x128xf32>
    %6 = vector.shape_cast %5 : vector<1x128xf32> to vector<1x128xf32>
    %7 = vector.broadcast %6 : vector<1x128xf32> to vector<8x128xf32>
    %8 = tpu.concatenate %4, %7 in 1 : vector<8x128xf32>, vector<8x128xf32> -> vector<8x256xf32>
    %9 = vector.extract_strided_slice %1 {offsets = [2, 0], sizes = [1, 128], strides = [1, 1]} : vector<3x128xf32> to vector<1x128xf32>
    %10 = vector.shape_cast %9 : vector<1x128xf32> to vector<1x128xf32>
    %11 = vector.broadcast %10 : vector<1x128xf32> to vector<8x128xf32>
    %cst = arith.constant 0.000000e+00 : f32
    %12 = vector.broadcast %cst : f32 to vector<8x128xf32>
    %cst_3 = arith.constant 0.000000e+00 : f32
    %13 = vector.broadcast %cst_3 : f32 to vector<8x128xf32>
    %c0_4 = arith.constant 0 : index
    %c0_5 = arith.constant 0 : index
    %c0_6 = arith.constant 0 : index
    %14 = vector.load %arg0[%c0_4, %c0_5, %c0_6] : memref<8x8x512xf32, #tpu.memory_space<vmem>>, vector<1x8x512xf32>
    %15 = vector.shape_cast %14 : vector<1x8x512xf32> to vector<8x512xf32>
    %16 = arith.truncf %12 : vector<8x128xf32> to vector<8x128xbf16>
    %cst_7 = arith.constant dense<0.000000e+00> : vector<8x512xf32>
    %17 = tpu.matmul %16, %0, %cst_7 {dimension_numbers = #tpu.dot_dimension_numbers<[1], [0], [0], [1], [0, 0, 1, 1], [], []>} : vector<8x128xbf16>, vector<128x512xbf16>, vector<8x512xf32> -> vector<8x512xf32>
    %18 = arith.addf %15, %17 : vector<8x512xf32>
    %19 = vector.extract_strided_slice %18 {offsets = [0, 0], sizes = [8, 256], strides = [1, 1]} : vector<8x512xf32> to vector<8x256xf32>
    %20 = tpu.concatenate %13, %13 in 1 : vector<8x128xf32>, vector<8x128xf32> -> vector<8x256xf32>
    %21 = arith.mulf %8, %20 : vector<8x256xf32>
    %22 = arith.addf %19, %21 : vector<8x256xf32>
    %23 = arith.negf %22 : vector<8x256xf32>
    %24 = math.exp %23 : vector<8x256xf32>
    %cst_8 = arith.constant 1.000000e+00 : f32
    %25 = vector.broadcast %cst_8 : f32 to vector<8x256xf32>
    %26 = arith.addf %25, %24 : vector<8x256xf32>
    %27 = arith.divf %25, %26 : vector<8x256xf32>
    %28 = vector.extract_strided_slice %27 {offsets = [0, 0], sizes = [8, 128], strides = [1, 1]} : vector<8x256xf32> to vector<8x128xf32>
    %29 = vector.extract_strided_slice %27 {offsets = [0, 128], sizes = [8, 128], strides = [1, 1]} : vector<8x256xf32> to vector<8x128xf32>
    %30 = arith.mulf %29, %13 : vector<8x128xf32>
    %31 = vector.extract_strided_slice %18 {offsets = [0, 256], sizes = [8, 128], strides = [1, 1]} : vector<8x512xf32> to vector<8x128xf32>
    %32 = math.tanh %31 : vector<8x128xf32>
    %33 = arith.mulf %28, %32 : vector<8x128xf32>
    %34 = arith.addf %30, %33 : vector<8x128xf32>
    %35 = vector.extract_strided_slice %18 {offsets = [0, 384], sizes = [8, 128], strides = [1, 1]} : vector<8x512xf32> to vector<8x128xf32>
    %36 = arith.mulf %11, %34 : vector<8x128xf32>
    %37 = arith.addf %35, %36 : vector<8x128xf32>
    %38 = arith.negf %37 : vector<8x128xf32>
    %39 = math.exp %38 : vector<8x128xf32>
    %cst_9 = arith.constant 1.000000e+00 : f32
    %40 = vector.broadcast %cst_9 : f32 to vector<8x128xf32>
    %41 = arith.addf %40, %39 : vector<8x128xf32>
    %42 = arith.divf %40, %41 : vector<8x128xf32>
    %43 = math.tanh %34 : vector<8x128xf32>
    %44 = arith.mulf %42, %43 : vector<8x128xf32>
    %c1 = arith.constant 1 : index
    %c0_10 = arith.constant 0 : index
    %c0_11 = arith.constant 0 : index
    %45 = vector.load %arg0[%c1, %c0_10, %c0_11] : memref<8x8x512xf32, #tpu.memory_space<vmem>>, vector<1x8x512xf32>
    %46 = vector.shape_cast %45 : vector<1x8x512xf32> to vector<8x512xf32>
    %47 = arith.truncf %44 : vector<8x128xf32> to vector<8x128xbf16>
    %cst_12 = arith.constant dense<0.000000e+00> : vector<8x512xf32>
    %48 = tpu.matmul %47, %0, %cst_12 {dimension_numbers = #tpu.dot_dimension_numbers<[1], [0], [0], [1], [0, 0, 1, 1], [], []>} : vector<8x128xbf16>, vector<128x512xbf16>, vector<8x512xf32> -> vector<8x512xf32>
    %49 = arith.addf %46, %48 : vector<8x512xf32>
    %50 = vector.extract_strided_slice %49 {offsets = [0, 0], sizes = [8, 256], strides = [1, 1]} : vector<8x512xf32> to vector<8x256xf32>
    %51 = tpu.concatenate %34, %34 in 1 : vector<8x128xf32>, vector<8x128xf32> -> vector<8x256xf32>
    %52 = arith.mulf %8, %51 : vector<8x256xf32>
    %53 = arith.addf %50, %52 : vector<8x256xf32>
    %54 = arith.negf %53 : vector<8x256xf32>
    %55 = math.exp %54 : vector<8x256xf32>
    %cst_13 = arith.constant 1.000000e+00 : f32
    %56 = vector.broadcast %cst_13 : f32 to vector<8x256xf32>
    %57 = arith.addf %56, %55 : vector<8x256xf32>
    %58 = arith.divf %56, %57 : vector<8x256xf32>
    %59 = vector.extract_strided_slice %58 {offsets = [0, 0], sizes = [8, 128], strides = [1, 1]} : vector<8x256xf32> to vector<8x128xf32>
    %60 = vector.extract_strided_slice %58 {offsets = [0, 128], sizes = [8, 128], strides = [1, 1]} : vector<8x256xf32> to vector<8x128xf32>
    %61 = arith.mulf %60, %34 : vector<8x128xf32>
    %62 = vector.extract_strided_slice %49 {offsets = [0, 256], sizes = [8, 128], strides = [1, 1]} : vector<8x512xf32> to vector<8x128xf32>
    %63 = math.tanh %62 : vector<8x128xf32>
    %64 = arith.mulf %59, %63 : vector<8x128xf32>
    %65 = arith.addf %61, %64 : vector<8x128xf32>
    %66 = vector.extract_strided_slice %49 {offsets = [0, 384], sizes = [8, 128], strides = [1, 1]} : vector<8x512xf32> to vector<8x128xf32>
    %67 = arith.mulf %11, %65 : vector<8x128xf32>
    %68 = arith.addf %66, %67 : vector<8x128xf32>
    %69 = arith.negf %68 : vector<8x128xf32>
    %70 = math.exp %69 : vector<8x128xf32>
    %cst_14 = arith.constant 1.000000e+00 : f32
    %71 = vector.broadcast %cst_14 : f32 to vector<8x128xf32>
    %72 = arith.addf %71, %70 : vector<8x128xf32>
    %73 = arith.divf %71, %72 : vector<8x128xf32>
    %74 = math.tanh %65 : vector<8x128xf32>
    %75 = arith.mulf %73, %74 : vector<8x128xf32>
    %c2 = arith.constant 2 : index
    %c0_15 = arith.constant 0 : index
    %c0_16 = arith.constant 0 : index
    %76 = vector.load %arg0[%c2, %c0_15, %c0_16] : memref<8x8x512xf32, #tpu.memory_space<vmem>>, vector<1x8x512xf32>
    %77 = vector.shape_cast %76 : vector<1x8x512xf32> to vector<8x512xf32>
    %78 = arith.truncf %75 : vector<8x128xf32> to vector<8x128xbf16>
    %cst_17 = arith.constant dense<0.000000e+00> : vector<8x512xf32>
    %79 = tpu.matmul %78, %0, %cst_17 {dimension_numbers = #tpu.dot_dimension_numbers<[1], [0], [0], [1], [0, 0, 1, 1], [], []>} : vector<8x128xbf16>, vector<128x512xbf16>, vector<8x512xf32> -> vector<8x512xf32>
    %80 = arith.addf %77, %79 : vector<8x512xf32>
    %81 = vector.extract_strided_slice %80 {offsets = [0, 0], sizes = [8, 256], strides = [1, 1]} : vector<8x512xf32> to vector<8x256xf32>
    %82 = tpu.concatenate %65, %65 in 1 : vector<8x128xf32>, vector<8x128xf32> -> vector<8x256xf32>
    %83 = arith.mulf %8, %82 : vector<8x256xf32>
    %84 = arith.addf %81, %83 : vector<8x256xf32>
    %85 = arith.negf %84 : vector<8x256xf32>
    %86 = math.exp %85 : vector<8x256xf32>
    %cst_18 = arith.constant 1.000000e+00 : f32
    %87 = vector.broadcast %cst_18 : f32 to vector<8x256xf32>
    %88 = arith.addf %87, %86 : vector<8x256xf32>
    %89 = arith.divf %87, %88 : vector<8x256xf32>
    %90 = vector.extract_strided_slice %89 {offsets = [0, 0], sizes = [8, 128], strides = [1, 1]} : vector<8x256xf32> to vector<8x128xf32>
    %91 = vector.extract_strided_slice %89 {offsets = [0, 128], sizes = [8, 128], strides = [1, 1]} : vector<8x256xf32> to vector<8x128xf32>
    %92 = arith.mulf %91, %65 : vector<8x128xf32>
    %93 = vector.extract_strided_slice %80 {offsets = [0, 256], sizes = [8, 128], strides = [1, 1]} : vector<8x512xf32> to vector<8x128xf32>
    %94 = math.tanh %93 : vector<8x128xf32>
    %95 = arith.mulf %90, %94 : vector<8x128xf32>
    %96 = arith.addf %92, %95 : vector<8x128xf32>
    %97 = vector.extract_strided_slice %80 {offsets = [0, 384], sizes = [8, 128], strides = [1, 1]} : vector<8x512xf32> to vector<8x128xf32>
    %98 = arith.mulf %11, %96 : vector<8x128xf32>
    %99 = arith.addf %97, %98 : vector<8x128xf32>
    %100 = arith.negf %99 : vector<8x128xf32>
    %101 = math.exp %100 : vector<8x128xf32>
    %cst_19 = arith.constant 1.000000e+00 : f32
    %102 = vector.broadcast %cst_19 : f32 to vector<8x128xf32>
    %103 = arith.addf %102, %101 : vector<8x128xf32>
    %104 = arith.divf %102, %103 : vector<8x128xf32>
    %105 = math.tanh %96 : vector<8x128xf32>
    %106 = arith.mulf %104, %105 : vector<8x128xf32>
    %c3 = arith.constant 3 : index
    %c0_20 = arith.constant 0 : index
    %c0_21 = arith.constant 0 : index
    %107 = vector.load %arg0[%c3, %c0_20, %c0_21] : memref<8x8x512xf32, #tpu.memory_space<vmem>>, vector<1x8x512xf32>
    %108 = vector.shape_cast %107 : vector<1x8x512xf32> to vector<8x512xf32>
    %109 = arith.truncf %106 : vector<8x128xf32> to vector<8x128xbf16>
    %cst_22 = arith.constant dense<0.000000e+00> : vector<8x512xf32>
    %110 = tpu.matmul %109, %0, %cst_22 {dimension_numbers = #tpu.dot_dimension_numbers<[1], [0], [0], [1], [0, 0, 1, 1], [], []>} : vector<8x128xbf16>, vector<128x512xbf16>, vector<8x512xf32> -> vector<8x512xf32>
    %111 = arith.addf %108, %110 : vector<8x512xf32>
    %112 = vector.extract_strided_slice %111 {offsets = [0, 0], sizes = [8, 256], strides = [1, 1]} : vector<8x512xf32> to vector<8x256xf32>
    %113 = tpu.concatenate %96, %96 in 1 : vector<8x128xf32>, vector<8x128xf32> -> vector<8x256xf32>
    %114 = arith.mulf %8, %113 : vector<8x256xf32>
    %115 = arith.addf %112, %114 : vector<8x256xf32>
    %116 = arith.negf %115 : vector<8x256xf32>
    %117 = math.exp %116 : vector<8x256xf32>
    %cst_23 = arith.constant 1.000000e+00 : f32
    %118 = vector.broadcast %cst_23 : f32 to vector<8x256xf32>
    %119 = arith.addf %118, %117 : vector<8x256xf32>
    %120 = arith.divf %118, %119 : vector<8x256xf32>
    %121 = vector.extract_strided_slice %120 {offsets = [0, 0], sizes = [8, 128], strides = [1, 1]} : vector<8x256xf32> to vector<8x128xf32>
    %122 = vector.extract_strided_slice %120 {offsets = [0, 128], sizes = [8, 128], strides = [1, 1]} : vector<8x256xf32> to vector<8x128xf32>
    %123 = arith.mulf %122, %96 : vector<8x128xf32>
    %124 = vector.extract_strided_slice %111 {offsets = [0, 256], sizes = [8, 128], strides = [1, 1]} : vector<8x512xf32> to vector<8x128xf32>
    %125 = math.tanh %124 : vector<8x128xf32>
    %126 = arith.mulf %121, %125 : vector<8x128xf32>
    %127 = arith.addf %123, %126 : vector<8x128xf32>
    %128 = vector.extract_strided_slice %111 {offsets = [0, 384], sizes = [8, 128], strides = [1, 1]} : vector<8x512xf32> to vector<8x128xf32>
    %129 = arith.mulf %11, %127 : vector<8x128xf32>
    %130 = arith.addf %128, %129 : vector<8x128xf32>
    %131 = arith.negf %130 : vector<8x128xf32>
    %132 = math.exp %131 : vector<8x128xf32>
    %cst_24 = arith.constant 1.000000e+00 : f32
    %133 = vector.broadcast %cst_24 : f32 to vector<8x128xf32>
    %134 = arith.addf %133, %132 : vector<8x128xf32>
    %135 = arith.divf %133, %134 : vector<8x128xf32>
    %136 = math.tanh %127 : vector<8x128xf32>
    %137 = arith.mulf %135, %136 : vector<8x128xf32>
    %c4 = arith.constant 4 : index
    %c0_25 = arith.constant 0 : index
    %c0_26 = arith.constant 0 : index
    %138 = vector.load %arg0[%c4, %c0_25, %c0_26] : memref<8x8x512xf32, #tpu.memory_space<vmem>>, vector<1x8x512xf32>
    %139 = vector.shape_cast %138 : vector<1x8x512xf32> to vector<8x512xf32>
    %140 = arith.truncf %137 : vector<8x128xf32> to vector<8x128xbf16>
    %cst_27 = arith.constant dense<0.000000e+00> : vector<8x512xf32>
    %141 = tpu.matmul %140, %0, %cst_27 {dimension_numbers = #tpu.dot_dimension_numbers<[1], [0], [0], [1], [0, 0, 1, 1], [], []>} : vector<8x128xbf16>, vector<128x512xbf16>, vector<8x512xf32> -> vector<8x512xf32>
    %142 = arith.addf %139, %141 : vector<8x512xf32>
    %143 = vector.extract_strided_slice %142 {offsets = [0, 0], sizes = [8, 256], strides = [1, 1]} : vector<8x512xf32> to vector<8x256xf32>
    %144 = tpu.concatenate %127, %127 in 1 : vector<8x128xf32>, vector<8x128xf32> -> vector<8x256xf32>
    %145 = arith.mulf %8, %144 : vector<8x256xf32>
    %146 = arith.addf %143, %145 : vector<8x256xf32>
    %147 = arith.negf %146 : vector<8x256xf32>
    %148 = math.exp %147 : vector<8x256xf32>
    %cst_28 = arith.constant 1.000000e+00 : f32
    %149 = vector.broadcast %cst_28 : f32 to vector<8x256xf32>
    %150 = arith.addf %149, %148 : vector<8x256xf32>
    %151 = arith.divf %149, %150 : vector<8x256xf32>
    %152 = vector.extract_strided_slice %151 {offsets = [0, 0], sizes = [8, 128], strides = [1, 1]} : vector<8x256xf32> to vector<8x128xf32>
    %153 = vector.extract_strided_slice %151 {offsets = [0, 128], sizes = [8, 128], strides = [1, 1]} : vector<8x256xf32> to vector<8x128xf32>
    %154 = arith.mulf %153, %127 : vector<8x128xf32>
    %155 = vector.extract_strided_slice %142 {offsets = [0, 256], sizes = [8, 128], strides = [1, 1]} : vector<8x512xf32> to vector<8x128xf32>
    %156 = math.tanh %155 : vector<8x128xf32>
    %157 = arith.mulf %152, %156 : vector<8x128xf32>
    %158 = arith.addf %154, %157 : vector<8x128xf32>
    %159 = vector.extract_strided_slice %142 {offsets = [0, 384], sizes = [8, 128], strides = [1, 1]} : vector<8x512xf32> to vector<8x128xf32>
    %160 = arith.mulf %11, %158 : vector<8x128xf32>
    %161 = arith.addf %159, %160 : vector<8x128xf32>
    %162 = arith.negf %161 : vector<8x128xf32>
    %163 = math.exp %162 : vector<8x128xf32>
    %cst_29 = arith.constant 1.000000e+00 : f32
    %164 = vector.broadcast %cst_29 : f32 to vector<8x128xf32>
    %165 = arith.addf %164, %163 : vector<8x128xf32>
    %166 = arith.divf %164, %165 : vector<8x128xf32>
    %167 = math.tanh %158 : vector<8x128xf32>
    %168 = arith.mulf %166, %167 : vector<8x128xf32>
    %c5 = arith.constant 5 : index
    %c0_30 = arith.constant 0 : index
    %c0_31 = arith.constant 0 : index
    %169 = vector.load %arg0[%c5, %c0_30, %c0_31] : memref<8x8x512xf32, #tpu.memory_space<vmem>>, vector<1x8x512xf32>
    %170 = vector.shape_cast %169 : vector<1x8x512xf32> to vector<8x512xf32>
    %171 = arith.truncf %168 : vector<8x128xf32> to vector<8x128xbf16>
    %cst_32 = arith.constant dense<0.000000e+00> : vector<8x512xf32>
    %172 = tpu.matmul %171, %0, %cst_32 {dimension_numbers = #tpu.dot_dimension_numbers<[1], [0], [0], [1], [0, 0, 1, 1], [], []>} : vector<8x128xbf16>, vector<128x512xbf16>, vector<8x512xf32> -> vector<8x512xf32>
    %173 = arith.addf %170, %172 : vector<8x512xf32>
    %174 = vector.extract_strided_slice %173 {offsets = [0, 0], sizes = [8, 256], strides = [1, 1]} : vector<8x512xf32> to vector<8x256xf32>
    %175 = tpu.concatenate %158, %158 in 1 : vector<8x128xf32>, vector<8x128xf32> -> vector<8x256xf32>
    %176 = arith.mulf %8, %175 : vector<8x256xf32>
    %177 = arith.addf %174, %176 : vector<8x256xf32>
    %178 = arith.negf %177 : vector<8x256xf32>
    %179 = math.exp %178 : vector<8x256xf32>
    %cst_33 = arith.constant 1.000000e+00 : f32
    %180 = vector.broadcast %cst_33 : f32 to vector<8x256xf32>
    %181 = arith.addf %180, %179 : vector<8x256xf32>
    %182 = arith.divf %180, %181 : vector<8x256xf32>
    %183 = vector.extract_strided_slice %182 {offsets = [0, 0], sizes = [8, 128], strides = [1, 1]} : vector<8x256xf32> to vector<8x128xf32>
    %184 = vector.extract_strided_slice %182 {offsets = [0, 128], sizes = [8, 128], strides = [1, 1]} : vector<8x256xf32> to vector<8x128xf32>
    %185 = arith.mulf %184, %158 : vector<8x128xf32>
    %186 = vector.extract_strided_slice %173 {offsets = [0, 256], sizes = [8, 128], strides = [1, 1]} : vector<8x512xf32> to vector<8x128xf32>
    %187 = math.tanh %186 : vector<8x128xf32>
    %188 = arith.mulf %183, %187 : vector<8x128xf32>
    %189 = arith.addf %185, %188 : vector<8x128xf32>
    %190 = vector.extract_strided_slice %173 {offsets = [0, 384], sizes = [8, 128], strides = [1, 1]} : vector<8x512xf32> to vector<8x128xf32>
    %191 = arith.mulf %11, %189 : vector<8x128xf32>
    %192 = arith.addf %190, %191 : vector<8x128xf32>
    %193 = arith.negf %192 : vector<8x128xf32>
    %194 = math.exp %193 : vector<8x128xf32>
    %cst_34 = arith.constant 1.000000e+00 : f32
    %195 = vector.broadcast %cst_34 : f32 to vector<8x128xf32>
    %196 = arith.addf %195, %194 : vector<8x128xf32>
    %197 = arith.divf %195, %196 : vector<8x128xf32>
    %198 = math.tanh %189 : vector<8x128xf32>
    %199 = arith.mulf %197, %198 : vector<8x128xf32>
    %c6 = arith.constant 6 : index
    %c0_35 = arith.constant 0 : index
    %c0_36 = arith.constant 0 : index
    %200 = vector.load %arg0[%c6, %c0_35, %c0_36] : memref<8x8x512xf32, #tpu.memory_space<vmem>>, vector<1x8x512xf32>
    %201 = vector.shape_cast %200 : vector<1x8x512xf32> to vector<8x512xf32>
    %202 = arith.truncf %199 : vector<8x128xf32> to vector<8x128xbf16>
    %cst_37 = arith.constant dense<0.000000e+00> : vector<8x512xf32>
    %203 = tpu.matmul %202, %0, %cst_37 {dimension_numbers = #tpu.dot_dimension_numbers<[1], [0], [0], [1], [0, 0, 1, 1], [], []>} : vector<8x128xbf16>, vector<128x512xbf16>, vector<8x512xf32> -> vector<8x512xf32>
    %204 = arith.addf %201, %203 : vector<8x512xf32>
    %205 = vector.extract_strided_slice %204 {offsets = [0, 0], sizes = [8, 256], strides = [1, 1]} : vector<8x512xf32> to vector<8x256xf32>
    %206 = tpu.concatenate %189, %189 in 1 : vector<8x128xf32>, vector<8x128xf32> -> vector<8x256xf32>
    %207 = arith.mulf %8, %206 : vector<8x256xf32>
    %208 = arith.addf %205, %207 : vector<8x256xf32>
    %209 = arith.negf %208 : vector<8x256xf32>
    %210 = math.exp %209 : vector<8x256xf32>
    %cst_38 = arith.constant 1.000000e+00 : f32
    %211 = vector.broadcast %cst_38 : f32 to vector<8x256xf32>
    %212 = arith.addf %211, %210 : vector<8x256xf32>
    %213 = arith.divf %211, %212 : vector<8x256xf32>
    %214 = vector.extract_strided_slice %213 {offsets = [0, 0], sizes = [8, 128], strides = [1, 1]} : vector<8x256xf32> to vector<8x128xf32>
    %215 = vector.extract_strided_slice %213 {offsets = [0, 128], sizes = [8, 128], strides = [1, 1]} : vector<8x256xf32> to vector<8x128xf32>
    %216 = arith.mulf %215, %189 : vector<8x128xf32>
    %217 = vector.extract_strided_slice %204 {offsets = [0, 256], sizes = [8, 128], strides = [1, 1]} : vector<8x512xf32> to vector<8x128xf32>
    %218 = math.tanh %217 : vector<8x128xf32>
    %219 = arith.mulf %214, %218 : vector<8x128xf32>
    %220 = arith.addf %216, %219 : vector<8x128xf32>
    %221 = vector.extract_strided_slice %204 {offsets = [0, 384], sizes = [8, 128], strides = [1, 1]} : vector<8x512xf32> to vector<8x128xf32>
    %222 = arith.mulf %11, %220 : vector<8x128xf32>
    %223 = arith.addf %221, %222 : vector<8x128xf32>
    %224 = arith.negf %223 : vector<8x128xf32>
    %225 = math.exp %224 : vector<8x128xf32>
    %cst_39 = arith.constant 1.000000e+00 : f32
    %226 = vector.broadcast %cst_39 : f32 to vector<8x128xf32>
    %227 = arith.addf %226, %225 : vector<8x128xf32>
    %228 = arith.divf %226, %227 : vector<8x128xf32>
    %229 = math.tanh %220 : vector<8x128xf32>
    %230 = arith.mulf %228, %229 : vector<8x128xf32>
    %c7 = arith.constant 7 : index
    %c0_40 = arith.constant 0 : index
    %c0_41 = arith.constant 0 : index
    %231 = vector.load %arg0[%c7, %c0_40, %c0_41] : memref<8x8x512xf32, #tpu.memory_space<vmem>>, vector<1x8x512xf32>
    %232 = vector.shape_cast %231 : vector<1x8x512xf32> to vector<8x512xf32>
    %233 = arith.truncf %230 : vector<8x128xf32> to vector<8x128xbf16>
    %cst_42 = arith.constant dense<0.000000e+00> : vector<8x512xf32>
    %234 = tpu.matmul %233, %0, %cst_42 {dimension_numbers = #tpu.dot_dimension_numbers<[1], [0], [0], [1], [0, 0, 1, 1], [], []>} : vector<8x128xbf16>, vector<128x512xbf16>, vector<8x512xf32> -> vector<8x512xf32>
    %235 = arith.addf %232, %234 : vector<8x512xf32>
    %236 = vector.extract_strided_slice %235 {offsets = [0, 0], sizes = [8, 256], strides = [1, 1]} : vector<8x512xf32> to vector<8x256xf32>
    %237 = tpu.concatenate %220, %220 in 1 : vector<8x128xf32>, vector<8x128xf32> -> vector<8x256xf32>
    %238 = arith.mulf %8, %237 : vector<8x256xf32>
    %239 = arith.addf %236, %238 : vector<8x256xf32>
    %240 = arith.negf %239 : vector<8x256xf32>
    %241 = math.exp %240 : vector<8x256xf32>
    %cst_43 = arith.constant 1.000000e+00 : f32
    %242 = vector.broadcast %cst_43 : f32 to vector<8x256xf32>
    %243 = arith.addf %242, %241 : vector<8x256xf32>
    %244 = arith.divf %242, %243 : vector<8x256xf32>
    %245 = vector.extract_strided_slice %244 {offsets = [0, 0], sizes = [8, 128], strides = [1, 1]} : vector<8x256xf32> to vector<8x128xf32>
    %246 = vector.extract_strided_slice %244 {offsets = [0, 128], sizes = [8, 128], strides = [1, 1]} : vector<8x256xf32> to vector<8x128xf32>
    %247 = arith.mulf %246, %220 : vector<8x128xf32>
    %248 = vector.extract_strided_slice %235 {offsets = [0, 256], sizes = [8, 128], strides = [1, 1]} : vector<8x512xf32> to vector<8x128xf32>
    %249 = math.tanh %248 : vector<8x128xf32>
    %250 = arith.mulf %245, %249 : vector<8x128xf32>
    %251 = arith.addf %247, %250 : vector<8x128xf32>
    %252 = vector.extract_strided_slice %235 {offsets = [0, 384], sizes = [8, 128], strides = [1, 1]} : vector<8x512xf32> to vector<8x128xf32>
    %253 = arith.mulf %11, %251 : vector<8x128xf32>
    %254 = arith.addf %252, %253 : vector<8x128xf32>
    %255 = arith.negf %254 : vector<8x128xf32>
    %256 = math.exp %255 : vector<8x128xf32>
    %cst_44 = arith.constant 1.000000e+00 : f32
    %257 = vector.broadcast %cst_44 : f32 to vector<8x128xf32>
    %258 = arith.addf %257, %256 : vector<8x128xf32>
    %259 = arith.divf %257, %258 : vector<8x128xf32>
    %260 = math.tanh %251 : vector<8x128xf32>
    %261 = arith.mulf %259, %260 : vector<8x128xf32>
    %c0_45 = arith.constant 0 : index
    %c0_46 = arith.constant 0 : index
    %262 = vector.load %arg3[%c0_45, %c0_46] : memref<8x128xf32, #tpu.memory_space<vmem>>, vector<8x128xf32>
    tpu.vector_store %arg3[%c0_45, %c0_46], %261 {strides = array<i32>} : memref<8x128xf32, #tpu.memory_space<vmem>>, vector<8x128xf32>,
    return
  }
}

</mosaic_0001>

<llo_original>
// kernel: tpu_custom_call.1
$region0: #{tpu_custom_call.1}
  #allocation0 [shape = 'u32[]', space=smem, size = 0x4, offset = 0x4, fixed_abs, tag = 'smem constant byte address 0x4 - core index']
  #allocation1 [shape = 'u32[144,128]{1,0:T(1,128)}', space=vmem, size = 0x12000, scoped, tag = 'internal scratch']
  %s0 = inlined_call_operand.hbm [shape: f32[8,8,512], index: 0, kind: input, shape index: {}]
  %s1 = inlined_call_operand.hbm [shape: bf16[128,512], index: 1, kind: input, shape index: {}]
  %s2 = inlined_call_operand.vmem [shape: f32[3,128], index: 2, kind: input, shape index: {}]
  %s3 = inlined_call_operand.hbm [shape: f32[8,128], index: 3, kind: output, shape index: {}]
  %s4 = sld [smem:[#allocation0]]
  $region30: #{tpu_custom_call.1} parent=0
    _
  %s6 = ssub.s32 1, %s4
  %s7 = scalar_select 0, %s6, %s4
  $region1: #{tpu_custom_call.1} parent=0
    #allocation2 [shape = 'u8[131072]{0}', space=vmem, size = 0x20000, scoped, tag = 'input window, operand 0, single buffered']
    #allocation3 [shape = 's32[1]{0}', space=sflag, size = 0x4, scoped, tag = 'scoped memory for tpu_custom_call.1']
    #allocation4 [shape = 's32[1]{0}', space=sflag, size = 0x4, scoped, tag = 'scoped memory for tpu_custom_call.1']
    #allocation5 [shape = 'u8[131072]{0}', space=vmem, size = 0x20000, scoped, tag = 'input window, operand 1, single buffered']
    #allocation6 [shape = 's32[1]{0}', space=sflag, size = 0x4, scoped, tag = 'scoped memory for tpu_custom_call.1']
    #allocation7 [shape = 'u8[4096]{0}', space=vmem, size = 0x1000, scoped, tag = 'output window, operand 0, single buffered']
    %8 = vsyncpa [#allocation3], 0
    %9 = vsyncpa [#allocation6], 0
    %10 = vsyncpa [#allocation4], 0
    // Predicated region
    $region2: #{tpu_custom_call.1} parent=1 // pred_check
      _
    $region3: #{tpu_custom_call.1} parent=1 // pred_check_branch
      %12 = sbr.rel (0) target = $region5
    $region4: #{tpu_custom_call.1} parent=1 // pred_region
      %s14 = ssub.s32 4096, 4096
      %15 = vsyncadd [#allocation3], %s14
      %s16 = sshll.u32 [#allocation2], 4
      %s17 = int_to_ptr.vmem [resolvable:$true] %s16
      %22 = dma.hbm_to_vmem [thread:$0]  %s0, 4096, %s17, [#allocation3], 512, 512, 32
    $region5: #{tpu_custom_call.1} parent=1 // pred_fallthru
      _
    // Predicated region
    $region6: #{tpu_custom_call.1} parent=1 // pred_check
      _
    $region7: #{tpu_custom_call.1} parent=1 // pred_check_branch
      %24 = sbr.rel (0) target = $region9
    $region8: #{tpu_custom_call.1} parent=1 // pred_region
      %s26 = ssub.s32 4096, 4096
      %27 = vsyncadd [#allocation6], %s26
      %s28 = sshll.u32 [#allocation5], 4
      %s29 = int_to_ptr.vmem [resolvable:$true] %s28
      %34 = dma.hbm_to_vmem [thread:$0]  %s1, 4096, %s29, [#allocation6], 256, 256, 16
    $region9: #{tpu_custom_call.1} parent=1 // pred_fallthru
      _
    // Predicated region
    $region10: #{tpu_custom_call.1} parent=1 // pred_check
      _
    $region11: #{tpu_custom_call.1} parent=1 // pred_check_branch
      %36 = sbr.rel (0) target = $region13
    $region12: #{tpu_custom_call.1} parent=1 // pred_region
      _
    $region13: #{tpu_custom_call.1} parent=1 // pred_fallthru
      _
    // Predicated region
    $region14: #{tpu_custom_call.1} parent=1 // pred_check
      _
    $region15: #{tpu_custom_call.1} parent=1 // pred_check_branch
      %38 = sbr.rel (0) target = $region17
    $region16: #{tpu_custom_call.1} parent=1 // pred_region
      %39 = dma.done [#allocation3], 4096
    $region17: #{tpu_custom_call.1} parent=1 // pred_fallthru
      _
    // Predicated region
    $region18: #{tpu_custom_call.1} parent=1 // pred_check
      _
    $region19: #{tpu_custom_call.1} parent=1 // pred_check_branch
      %41 = sbr.rel (0) target = $region21
    $region20: #{tpu_custom_call.1} parent=1 // pred_region
      %42 = dma.done [#allocation6], 4096
    $region21: #{tpu_custom_call.1} parent=1 // pred_fallthru
      _
    %v44 = vld [vmem:[#allocation5] sm:$0xff]
    %v45 = vld [vmem:[#allocation5 + $0x8] sm:$0xff]
    %v46 = vld [vmem:[#allocation5 + $0x10] sm:$0xff]
    %v47 = vld [vmem:[#allocation5 + $0x18] sm:$0xff]
    %v48 = vld [vmem:[#allocation5 + $0x20] sm:$0xff]
    %v49 = vld [vmem:[#allocation5 + $0x28] sm:$0xff]
    %v50 = vld [vmem:[#allocation5 + $0x30] sm:$0xff]
    %v51 = vld [vmem:[#allocation5 + $0x38] sm:$0xff]
    %v52 = vld [vmem:[#allocation5 + $0x40] sm:$0xff]
    %v53 = vld [vmem:[#allocation5 + $0x48] sm:$0xff]
    %v54 = vld [vmem:[#allocation5 + $0x50] sm:$0xff]
    %v55 = vld [vmem:[#allocation5 + $0x58] sm:$0xff]
    %v56 = vld [vmem:[#allocation5 + $0x60] sm:$0xff]
    %v57 = vld [vmem:[#allocation5 + $0x68] sm:$0xff]
    %v58 = vld [vmem:[#allocation5 + $0x70] sm:$0xff]
    %v59 = vld [vmem:[#allocation5 + $0x78] sm:$0xff]
    %v60 = vld [vmem:[#allocation5 + $0x80] sm:$0xff]
    %v61 = vld [vmem:[#allocation5 + $0x88] sm:$0xff]
    %v62 = vld [vmem:[#allocation5 + $0x90] sm:$0xff]
    %v63 = vld [vmem:[#allocation5 + $0x98] sm:$0xff]
    %v64 = vld [vmem:[#allocation5 + $0xa0] sm:$0xff]
    %v65 = vld [vmem:[#allocation5 + $0xa8] sm:$0xff]
    %v66 = vld [vmem:[#allocation5 + $0xb0] sm:$0xff]
    %v67 = vld [vmem:[#allocation5 + $0xb8] sm:$0xff]
    %v68 = vld [vmem:[#allocation5 + $0xc0] sm:$0xff]
    %v69 = vld [vmem:[#allocation5 + $0xc8] sm:$0xff]
    %v70 = vld [vmem:[#allocation5 + $0xd0] sm:$0xff]
    %v71 = vld [vmem:[#allocation5 + $0xd8] sm:$0xff]
    %v72 = vld [vmem:[#allocation5 + $0xe0] sm:$0xff]
    %v73 = vld [vmem:[#allocation5 + $0xe8] sm:$0xff]
    %v74 = vld [vmem:[#allocation5 + $0xf0] sm:$0xff]
    %v75 = vld [vmem:[#allocation5 + $0xf8] sm:$0xff]
    %v76 = vld [vmem:[%s2] sm:$0x7]
    %v77 = vlaneseq
    %v78 = vshrl.u32 %v77, 7
    %v79 = vsub.s32 0, %v78
    %v80 = vrot.slane %v76, %v79
    %v81 = vlaneseq
    %v82 = vshrl.u32 %v81, 7
    %v83 = vsub.s32 1, %v82
    %v84 = vrot.slane %v76, %v83
    %v85 = vlaneseq
    %v86 = vshrl.u32 %v85, 7
    %v87 = vsub.s32 2, %v86
    %v88 = vrot.slane %v76, %v87
    %v89 = vld [vmem:[#allocation2] sm:$0xff]
    %v90 = vld [vmem:[#allocation2 + $0x8] sm:$0xff]
    %v91 = vld [vmem:[#allocation2 + $0x10] sm:$0xff]
    %v92 = vld [vmem:[#allocation2 + $0x18] sm:$0xff]
    %v125 = vunpack.c.l.b16 %v44
    %v126 = vunpack.c.h.b16 %v44
    %v127 = vunpack.c.l.b16 %v45
    %v128 = vunpack.c.h.b16 %v45
    %v129 = vunpack.c.l.b16 %v46
    %v130 = vunpack.c.h.b16 %v46
    %v131 = vunpack.c.l.b16 %v47
    %v132 = vunpack.c.h.b16 %v47
    %v133 = vunpack.c.l.b16 %v48
    %v134 = vunpack.c.h.b16 %v48
    %v135 = vunpack.c.l.b16 %v49
    %v136 = vunpack.c.h.b16 %v49
    %v137 = vunpack.c.l.b16 %v50
    %v138 = vunpack.c.h.b16 %v50
    %v139 = vunpack.c.l.b16 %v51
    %v140 = vunpack.c.h.b16 %v51
    %v141 = vunpack.c.l.b16 %v52
    %v142 = vunpack.c.h.b16 %v52
    %v143 = vunpack.c.l.b16 %v53
    %v144 = vunpack.c.h.b16 %v53
    %v145 = vunpack.c.l.b16 %v54
    %v146 = vunpack.c.h.b16 %v54
    %v147 = vunpack.c.l.b16 %v55
    %v148 = vunpack.c.h.b16 %v55
    %v149 = vunpack.c.l.b16 %v56
    %v150 = vunpack.c.h.b16 %v56
    %v151 = vunpack.c.l.b16 %v57
    %v152 = vunpack.c.h.b16 %v57
    %v153 = vunpack.c.l.b16 %v58
    %v154 = vunpack.c.h.b16 %v58
    %v155 = vunpack.c.l.b16 %v59
    %v156 = vunpack.c.h.b16 %v59
    %v157 = vunpack.c.l.b16 %v60
    %v158 = vunpack.c.h.b16 %v60
    %v159 = vunpack.c.l.b16 %v61
    %v160 = vunpack.c.h.b16 %v61
    %v161 = vunpack.c.l.b16 %v62
    %v162 = vunpack.c.h.b16 %v62
    %v163 = vunpack.c.l.b16 %v63
    %v164 = vunpack.c.h.b16 %v63
    %v165 = vunpack.c.l.b16 %v64
    %v166 = vunpack.c.h.b16 %v64
    %v167 = vunpack.c.l.b16 %v65
    %v168 = vunpack.c.h.b16 %v65
    %v169 = vunpack.c.l.b16 %v66
    %v170 = vunpack.c.h.b16 %v66
    %v171 = vunpack.c.l.b16 %v67
    %v172 = vunpack.c.h.b16 %v67
    %v173 = vunpack.c.l.b16 %v68
    %v174 = vunpack.c.h.b16 %v68
    %v175 = vunpack.c.l.b16 %v69
    %v176 = vunpack.c.h.b16 %v69
    %v177 = vunpack.c.l.b16 %v70
    %v178 = vunpack.c.h.b16 %v70
    %v179 = vunpack.c.l.b16 %v71
    %v180 = vunpack.c.h.b16 %v71
    %v181 = vunpack.c.l.b16 %v72
    %v182 = vunpack.c.h.b16 %v72
    %v183 = vunpack.c.l.b16 %v73
    %v184 = vunpack.c.h.b16 %v73
    %v185 = vunpack.c.l.b16 %v74
    %v186 = vunpack.c.h.b16 %v74
    %v187 = vunpack.c.l.b16 %v75
    %v188 = vunpack.c.h.b16 %v75
    %v189 = vpack.c.b16 %v129, %v125
    %v190 = vpack.c.b16 %v130, %v126
    %v191 = vpack.c.b16 %v131, %v127
    %v192 = vpack.c.b16 %v132, %v128
    %v193 = vpack.c.b16 %v137, %v133
    %v194 = vpack.c.b16 %v138, %v134
    %v195 = vpack.c.b16 %v139, %v135
    %v196 = vpack.c.b16 %v140, %v136
    %v197 = vpack.c.b16 %v145, %v141
    %v198 = vpack.c.b16 %v146, %v142
    %v199 = vpack.c.b16 %v147, %v143
    %v200 = vpack.c.b16 %v148, %v144
    %v201 = vpack.c.b16 %v153, %v149
    %v202 = vpack.c.b16 %v154, %v150
    %v203 = vpack.c.b16 %v155, %v151
    %v204 = vpack.c.b16 %v156, %v152
    %v205 = vpack.c.b16 %v161, %v157
    %v206 = vpack.c.b16 %v162, %v158
    %v207 = vpack.c.b16 %v163, %v159
    %v208 = vpack.c.b16 %v164, %v160
    %v209 = vpack.c.b16 %v169, %v165
    %v210 = vpack.c.b16 %v170, %v166
    %v211 = vpack.c.b16 %v171, %v167
    %v212 = vpack.c.b16 %v172, %v168
    %v213 = vpack.c.b16 %v177, %v173
    %v214 = vpack.c.b16 %v178, %v174
    %v215 = vpack.c.b16 %v179, %v175
    %v216 = vpack.c.b16 %v180, %v176
    %v217 = vpack.c.b16 %v185, %v181
    %v218 = vpack.c.b16 %v186, %v182
    %v219 = vpack.c.b16 %v187, %v183
    %v220 = vpack.c.b16 %v188, %v184
    %253 = vmatprep.subr.bf16.mxu0 %v190
    %254 = vmatpush1.bf16.msra.mxu0 %v189
    %255 = vmatprep.subr.bf16.mxu0 %v194
    %256 = vmatpush1.bf16.msra.mxu0 %v193
    %257 = vmatprep.subr.bf16.mxu0 %v198
    %258 = vmatpush1.bf16.msra.mxu0 %v197
    %259 = vmatprep.subr.bf16.mxu0 %v202
    %260 = vmatpush1.bf16.msra.mxu0 %v201
    %261 = vmatprep.subr.bf16.mxu0 %v206
    %262 = vmatpush1.bf16.msra.mxu0 %v205
    %263 = vmatprep.subr.bf16.mxu0 %v210
    %264 = vmatpush1.bf16.msra.mxu0 %v209
    %265 = vmatprep.subr.bf16.mxu0 %v214
    %266 = vmatpush1.bf16.msra.mxu0 %v213
    %267 = vmatprep.subr.bf16.mxu0 %v218
    %268 = vmatpush1.bf16.msra.mxu0 %v217
    %269 = vmatprep.subr.bf16.mxu0 0
    %270 = vmatpush1.bf16.msra.mxu0 0
    %271 = vmatprep.subr.bf16.mxu0 0
    %272 = vmatpush1.bf16.msra.mxu0 0
    %273 = vmatprep.subr.bf16.mxu0 0
    %274 = vmatpush1.bf16.msra.mxu0 0
    %275 = vmatprep.subr.bf16.mxu0 0
    %276 = vmatpush1.bf16.msra.mxu0 0
    %277 = vmatprep.subr.bf16.mxu0 0
    %278 = vmatpush1.bf16.msra.mxu0 0
    %279 = vmatprep.subr.bf16.mxu0 0
    %280 = vmatpush1.bf16.msra.mxu0 0
    %281 = vmatprep.subr.bf16.mxu0 0
    %282 = vmatpush1.bf16.msra.mxu0 0
    %283 = vmatprep.subr.bf16.mxu0 0
    %284 = vmatpush1.bf16.msra.mxu0 0
    %285 = vmatprep.mubr.bf16.mxu0 0
    %286 = vmatmul.mubr.bf16.gmra.mrb[0].mxu0 0
    %v287 = vpop.f32.mrb[0].mxu0
    %v288 = vadd.f32 0.0, %v287
    %v289 = vpop.f32.mrb[0].mxu0
    %v290 = vadd.f32 0.0, %v289
    %v291 = vpop.f32.mrb[0].mxu0
    %v292 = vpop.f32.mrb[0].mxu0
    %293 = vdwg.mxu0
    %294 = vmatprep.subr.bf16.mxu0 %v192
    %295 = vmatpush1.bf16.msra.mxu0 %v191
    %296 = vmatprep.subr.bf16.mxu0 %v196
    %297 = vmatpush1.bf16.msra.mxu0 %v195
    %298 = vmatprep.subr.bf16.mxu0 %v200
    %299 = vmatpush1.bf16.msra.mxu0 %v199
    %300 = vmatprep.subr.bf16.mxu0 %v204
    %301 = vmatpush1.bf16.msra.mxu0 %v203
    %302 = vmatprep.subr.bf16.mxu0 %v208
    %303 = vmatpush1.bf16.msra.mxu0 %v207
    %304 = vmatprep.subr.bf16.mxu0 %v212
    %305 = vmatpush1.bf16.msra.mxu0 %v211
    %306 = vmatprep.subr.bf16.mxu0 %v216
    %307 = vmatpush1.bf16.msra.mxu0 %v215
    %308 = vmatprep.subr.bf16.mxu0 %v220
    %309 = vmatpush1.bf16.msra.mxu0 %v219
    %310 = vmatprep.subr.bf16.mxu0 0
    %311 = vmatpush1.bf16.msra.mxu0 0
    %312 = vmatprep.subr.bf16.mxu0 0
    %313 = vmatpush1.bf16.msra.mxu0 0
    %314 = vmatprep.subr.bf16.mxu0 0
    %315 = vmatpush1.bf16.msra.mxu0 0
    %316 = vmatprep.subr.bf16.mxu0 0
    %317 = vmatpush1.bf16.msra.mxu0 0
    %318 = vmatprep.subr.bf16.mxu0 0
    %319 = vmatpush1.bf16.msra.mxu0 0
    %320 = vmatprep.subr.bf16.mxu0 0
    %321 = vmatpush1.bf16.msra.mxu0 0
    %322 = vmatprep.subr.bf16.mxu0 0
    %323 = vmatpush1.bf16.msra.mxu0 0
    %324 = vmatprep.subr.bf16.mxu0 0
    %325 = vmatpush1.bf16.msra.mxu0 0
    %326 = vmatprep.mubr.bf16.mxu0 0
    %327 = vmatmul.mubr.bf16.gmra.mrb[0].mxu0 0
    %v328 = vpop.f32.mrb[0].mxu0
    %v329 = vadd.f32 0.0, %v328
    %v330 = vpop.f32.mrb[0].mxu0
    %v331 = vadd.f32 0.0, %v330
    %v332 = vpop.f32.mrb[0].mxu0
    %v333 = vpop.f32.mrb[0].mxu0
    %334 = vdwg.mxu0
    %v335 = vadd.f32 %v89, %v288
    %v336 = vadd.f32 %v90, %v290
    %v337 = vadd.f32 %v91, %v329
    %v338 = vadd.f32 %v92, %v331
    %v339 = vmul.f32 %v80, 0.0
    %v340 = vmul.f32 %v84, 0.0
    %v341 = vadd.f32 %v335, %v339
    %v342 = vadd.f32 %v336, %v340
    %v343 = vxor.u32 %v341, 2147483648
    %v344 = vxor.u32 %v342, 2147483648
    %v345 = vmul.f32 %v343, 1.442695
    %v346 = vpow.pop %v345
    %v347 = vmul.f32 %v344, 1.442695
    %v348 = vpow.pop %v347
    %v349 = vadd.f32 %v346, 1.0
    %v350 = vadd.f32 %v348, 1.0
    %v351 = vrcp.pop %v349
    %v352 = vmul.f32 1.0, %v351
    %v353 = vrcp.pop %v350
    %v354 = vmul.f32 1.0, %v353
    %v355 = vmul.f32 %v354, 0.0
    %v356 = vtanh.pop %v337
    %v357 = vmul.f32 %v352, %v356
    %v358 = vadd.f32 %v355, %v357
    %v359 = vmul.f32 %v88, %v358
    %v360 = vadd.f32 %v338, %v359
    %v361 = vxor.u32 %v360, 2147483648
    %v362 = vmul.f32 %v361, 1.442695
    %v363 = vpow.pop %v362
    %v364 = vadd.f32 %v363, 1.0
    %v365 = vrcp.pop %v364
    %v366 = vmul.f32 1.0, %v365
    %v367 = vtanh.pop %v358
    %v368 = vmul.f32 %v366, %v367
    %s369 = scalar_lea.vmem [#allocation2], 32
    %v370 = vld [vmem:[%s369] sm:$0xff]
    %v371 = vld [vmem:[%s369 + $0x8] sm:$0xff]
    %v372 = vld [vmem:[%s369 + $0x10] sm:$0xff]
    %v373 = vld [vmem:[%s369 + $0x18] sm:$0xff]
    %v374 = vpack.c.bf16 %v368, %v368
    %375 = vmatprep.subr.bf16.mxu0 %v190
    %376 = vmatpush1.bf16.msra.mxu0 %v189
    %377 = vmatprep.subr.bf16.mxu0 %v194
    %378 = vmatpush1.bf16.msra.mxu0 %v193
    %379 = vmatprep.subr.bf16.mxu0 %v198
    %380 = vmatpush1.bf16.msra.mxu0 %v197
    %381 = vmatprep.subr.bf16.mxu0 %v202
    %382 = vmatpush1.bf16.msra.mxu0 %v201
    %383 = vmatprep.subr.bf16.mxu0 %v206
    %384 = vmatpush1.bf16.msra.mxu0 %v205
    %385 = vmatprep.subr.bf16.mxu0 %v210
    %386 = vmatpush1.bf16.msra.mxu0 %v209
    %387 = vmatprep.subr.bf16.mxu0 %v214
    %388 = vmatpush1.bf16.msra.mxu0 %v213
    %389 = vmatprep.subr.bf16.mxu0 %v218
    %390 = vmatpush1.bf16.msra.mxu0 %v217
    %391 = vmatprep.subr.bf16.mxu0 0
    %392 = vmatpush1.bf16.msra.mxu0 0
    %393 = vmatprep.subr.bf16.mxu0 0
    %394 = vmatpush1.bf16.msra.mxu0 0
    %395 = vmatprep.subr.bf16.mxu0 0
    %396 = vmatpush1.bf16.msra.mxu0 0
    %397 = vmatprep.subr.bf16.mxu0 0
    %398 = vmatpush1.bf16.msra.mxu0 0
    %399 = vmatprep.subr.bf16.mxu0 0
    %400 = vmatpush1.bf16.msra.mxu0 0
    %401 = vmatprep.subr.bf16.mxu0 0
    %402 = vmatpush1.bf16.msra.mxu0 0
    %403 = vmatprep.subr.bf16.mxu0 0
    %404 = vmatpush1.bf16.msra.mxu0 0
    %405 = vmatprep.subr.bf16.mxu0 0
    %406 = vmatpush1.bf16.msra.mxu0 0
    %407 = vmatprep.mubr.bf16.mxu0 0
    %408 = vmatmul.mubr.bf16.gmra.mrb[0].mxu0 %v374
    %v409 = vpop.f32.mrb[0].mxu0
    %v410 = vadd.f32 0.0, %v409
    %v411 = vpop.f32.mrb[0].mxu0
    %v412 = vadd.f32 0.0, %v411
    %v413 = vpop.f32.mrb[0].mxu0
    %v414 = vpop.f32.mrb[0].mxu0
    %415 = vdwg.mxu0
    %416 = vmatprep.subr.bf16.mxu0 %v192
    %417 = vmatpush1.bf16.msra.mxu0 %v191
    %418 = vmatprep.subr.bf16.mxu0 %v196
    %419 = vmatpush1.bf16.msra.mxu0 %v195
    %420 = vmatprep.subr.bf16.mxu0 %v200
    %421 = vmatpush1.bf16.msra.mxu0 %v199
    %422 = vmatprep.subr.bf16.mxu0 %v204
    %423 = vmatpush1.bf16.msra.mxu0 %v203
    %424 = vmatprep.subr.bf16.mxu0 %v208
    %425 = vmatpush1.bf16.msra.mxu0 %v207
    %426 = vmatprep.subr.bf16.mxu0 %v212
    %427 = vmatpush1.bf16.msra.mxu0 %v211
    %428 = vmatprep.subr.bf16.mxu0 %v216
    %429 = vmatpush1.bf16.msra.mxu0 %v215
    %430 = vmatprep.subr.bf16.mxu0 %v220
    %431 = vmatpush1.bf16.msra.mxu0 %v219
    %432 = vmatprep.subr.bf16.mxu0 0
    %433 = vmatpush1.bf16.msra.mxu0 0
    %434 = vmatprep.subr.bf16.mxu0 0
    %435 = vmatpush1.bf16.msra.mxu0 0
    %436 = vmatprep.subr.bf16.mxu0 0
    %437 = vmatpush1.bf16.msra.mxu0 0
    %438 = vmatprep.subr.bf16.mxu0 0
    %439 = vmatpush1.bf16.msra.mxu0 0
    %440 = vmatprep.subr.bf16.mxu0 0
    %441 = vmatpush1.bf16.msra.mxu0 0
    %442 = vmatprep.subr.bf16.mxu0 0
    %443 = vmatpush1.bf16.msra.mxu0 0
    %444 = vmatprep.subr.bf16.mxu0 0
    %445 = vmatpush1.bf16.msra.mxu0 0
    %446 = vmatprep.subr.bf16.mxu0 0
    %447 = vmatpush1.bf16.msra.mxu0 0
    %448 = vmatprep.mubr.bf16.mxu0 0
    %449 = vmatmul.mubr.bf16.gmra.mrb[0].mxu0 %v374
    %v450 = vpop.f32.mrb[0].mxu0
    %v451 = vadd.f32 0.0, %v450
    %v452 = vpop.f32.mrb[0].mxu0
    %v453 = vadd.f32 0.0, %v452
    %v454 = vpop.f32.mrb[0].mxu0
    %v455 = vpop.f32.mrb[0].mxu0
    %456 = vdwg.mxu0
    %v457 = vadd.f32 %v370, %v410
    %v458 = vadd.f32 %v371, %v412
    %v459 = vadd.f32 %v372, %v451
    %v460 = vadd.f32 %v373, %v453
    %v461 = vmul.f32 %v80, %v358
    %v462 = vmul.f32 %v84, %v358
    %v463 = vadd.f32 %v457, %v461
    %v464 = vadd.f32 %v458, %v462
    %v465 = vxor.u32 %v463, 2147483648
    %v466 = vxor.u32 %v464, 2147483648
    %v467 = vmul.f32 %v465, 1.442695
    %v468 = vpow.pop %v467
    %v469 = vmul.f32 %v466, 1.442695
    %v470 = vpow.pop %v469
    %v471 = vadd.f32 %v468, 1.0
    %v472 = vadd.f32 %v470, 1.0
    %v473 = vrcp.pop %v471
    %v474 = vmul.f32 1.0, %v473
    %v475 = vrcp.pop %v472
    %v476 = vmul.f32 1.0, %v475
    %v477 = vmul.f32 %v476, %v358
    %v478 = vtanh.pop %v459
    %v479 = vmul.f32 %v474, %v478
    %v480 = vadd.f32 %v477, %v479
    %v481 = vmul.f32 %v88, %v480
    %v482 = vadd.f32 %v460, %v481
    %v483 = vxor.u32 %v482, 2147483648
    %v484 = vmul.f32 %v483, 1.442695
    %v485 = vpow.pop %v484
    %v486 = vadd.f32 %v485, 1.0
    %v487 = vrcp.pop %v486
    %v488 = vmul.f32 1.0, %v487
    %v489 = vtanh.pop %v480
    %v490 = vmul.f32 %v488, %v489
    %s491 = scalar_lea.vmem [#allocation2], 64
    %v492 = vld [vmem:[%s491] sm:$0xff]
    %v493 = vld [vmem:[%s491 + $0x8] sm:$0xff]
    %v494 = vld [vmem:[%s491 + $0x10] sm:$0xff]
    %v495 = vld [vmem:[%s491 + $0x18] sm:$0xff]
    %v496 = vpack.c.bf16 %v490, %v490
    %497 = vmatprep.subr.bf16.mxu0 %v190
    %498 = vmatpush1.bf16.msra.mxu0 %v189
    %499 = vmatprep.subr.bf16.mxu0 %v194
    %500 = vmatpush1.bf16.msra.mxu0 %v193
    %501 = vmatprep.subr.bf16.mxu0 %v198
    %502 = vmatpush1.bf16.msra.mxu0 %v197
    %503 = vmatprep.subr.bf16.mxu0 %v202
    %504 = vmatpush1.bf16.msra.mxu0 %v201
    %505 = vmatprep.subr.bf16.mxu0 %v206
    %506 = vmatpush1.bf16.msra.mxu0 %v205
    %507 = vmatprep.subr.bf16.mxu0 %v210
    %508 = vmatpush1.bf16.msra.mxu0 %v209
    %509 = vmatprep.subr.bf16.mxu0 %v214
    %510 = vmatpush1.bf16.msra.mxu0 %v213
    %511 = vmatprep.subr.bf16.mxu0 %v218
    %512 = vmatpush1.bf16.msra.mxu0 %v217
    %513 = vmatprep.subr.bf16.mxu0 0
    %514 = vmatpush1.bf16.msra.mxu0 0
    %515 = vmatprep.subr.bf16.mxu0 0
    %516 = vmatpush1.bf16.msra.mxu0 0
    %517 = vmatprep.subr.bf16.mxu0 0
    %518 = vmatpush1.bf16.msra.mxu0 0
    %519 = vmatprep.subr.bf16.mxu0 0
    %520 = vmatpush1.bf16.msra.mxu0 0
    %521 = vmatprep.subr.bf16.mxu0 0
    %522 = vmatpush1.bf16.msra.mxu0 0
    %523 = vmatprep.subr.bf16.mxu0 0
    %524 = vmatpush1.bf16.msra.mxu0 0
    %525 = vmatprep.subr.bf16.mxu0 0
    %526 = vmatpush1.bf16.msra.mxu0 0
    %527 = vmatprep.subr.bf16.mxu0 0
    %528 = vmatpush1.bf16.msra.mxu0 0
    %529 = vmatprep.mubr.bf16.mxu0 0
    %530 = vmatmul.mubr.bf16.gmra.mrb[0].mxu0 %v496
    %v531 = vpop.f32.mrb[0].mxu0
    %v532 = vadd.f32 0.0, %v531
    %v533 = vpop.f32.mrb[0].mxu0
    %v534 = vadd.f32 0.0, %v533
    %v535 = vpop.f32.mrb[0].mxu0
    %v536 = vpop.f32.mrb[0].mxu0
    %537 = vdwg.mxu0
    %538 = vmatprep.subr.bf16.mxu0 %v192
    %539 = vmatpush1.bf16.msra.mxu0 %v191
    %540 = vmatprep.subr.bf16.mxu0 %v196
    %541 = vmatpush1.bf16.msra.mxu0 %v195
    %542 = vmatprep.subr.bf16.mxu0 %v200
    %543 = vmatpush1.bf16.msra.mxu0 %v199
    %544 = vmatprep.subr.bf16.mxu0 %v204
    %545 = vmatpush1.bf16.msra.mxu0 %v203
    %546 = vmatprep.subr.bf16.mxu0 %v208
    %547 = vmatpush1.bf16.msra.mxu0 %v207
    %548 = vmatprep.subr.bf16.mxu0 %v212
    %549 = vmatpush1.bf16.msra.mxu0 %v211
    %550 = vmatprep.subr.bf16.mxu0 %v216
    %551 = vmatpush1.bf16.msra.mxu0 %v215
    %552 = vmatprep.subr.bf16.mxu0 %v220
    %553 = vmatpush1.bf16.msra.mxu0 %v219
    %554 = vmatprep.subr.bf16.mxu0 0
    %555 = vmatpush1.bf16.msra.mxu0 0
    %556 = vmatprep.subr.bf16.mxu0 0
    %557 = vmatpush1.bf16.msra.mxu0 0
    %558 = vmatprep.subr.bf16.mxu0 0
    %559 = vmatpush1.bf16.msra.mxu0 0
    %560 = vmatprep.subr.bf16.mxu0 0
    %561 = vmatpush1.bf16.msra.mxu0 0
    %562 = vmatprep.subr.bf16.mxu0 0
    %563 = vmatpush1.bf16.msra.mxu0 0
    %564 = vmatprep.subr.bf16.mxu0 0
    %565 = vmatpush1.bf16.msra.mxu0 0
    %566 = vmatprep.subr.bf16.mxu0 0
    %567 = vmatpush1.bf16.msra.mxu0 0
    %568 = vmatprep.subr.bf16.mxu0 0
    %569 = vmatpush1.bf16.msra.mxu0 0
    %570 = vmatprep.mubr.bf16.mxu0 0
    %571 = vmatmul.mubr.bf16.gmra.mrb[0].mxu0 %v496
    %v572 = vpop.f32.mrb[0].mxu0
    %v573 = vadd.f32 0.0, %v572
    %v574 = vpop.f32.mrb[0].mxu0
    %v575 = vadd.f32 0.0, %v574
    %v576 = vpop.f32.mrb[0].mxu0
    %v577 = vpop.f32.mrb[0].mxu0
    %578 = vdwg.mxu0
    %v579 = vadd.f32 %v492, %v532
    %v580 = vadd.f32 %v493, %v534
    %v581 = vadd.f32 %v494, %v573
    %v582 = vadd.f32 %v495, %v575
    %v583 = vmul.f32 %v80, %v480
    %v584 = vmul.f32 %v84, %v480
    %v585 = vadd.f32 %v579, %v583
    %v586 = vadd.f32 %v580, %v584
    %v587 = vxor.u32 %v585, 2147483648
    %v588 = vxor.u32 %v586, 2147483648
    %v589 = vmul.f32 %v587, 1.442695
    %v590 = vpow.pop %v589
    %v591 = vmul.f32 %v588, 1.442695
    %v592 = vpow.pop %v591
    %v593 = vadd.f32 %v590, 1.0
    %v594 = vadd.f32 %v592, 1.0
    %v595 = vrcp.pop %v593
    %v596 = vmul.f32 1.0, %v595
    %v597 = vrcp.pop %v594
    %v598 = vmul.f32 1.0, %v597
    %v599 = vmul.f32 %v598, %v480
    %v600 = vtanh.pop %v581
    %v601 = vmul.f32 %v596, %v600
    %v602 = vadd.f32 %v599, %v601
    %v603 = vmul.f32 %v88, %v602
    %v604 = vadd.f32 %v582, %v603
    %v605 = vxor.u32 %v604, 2147483648
    %v606 = vmul.f32 %v605, 1.442695
    %v607 = vpow.pop %v606
    %v608 = vadd.f32 %v607, 1.0
    %v609 = vrcp.pop %v608
    %v610 = vmul.f32 1.0, %v609
    %v611 = vtanh.pop %v602
    %v612 = vmul.f32 %v610, %v611
    %s613 = scalar_lea.vmem [#allocation2], 96
    %v614 = vld [vmem:[%s613] sm:$0xff]
    %v615 = vld [vmem:[%s613 + $0x8] sm:$0xff]
    %v616 = vld [vmem:[%s613 + $0x10] sm:$0xff]
    %v617 = vld [vmem:[%s613 + $0x18] sm:$0xff]
    %v618 = vpack.c.bf16 %v612, %v612
    %619 = vmatprep.subr.bf16.mxu0 %v190
    %620 = vmatpush1.bf16.msra.mxu0 %v189
    %621 = vmatprep.subr.bf16.mxu0 %v194
    %622 = vmatpush1.bf16.msra.mxu0 %v193
    %623 = vmatprep.subr.bf16.mxu0 %v198
    %624 = vmatpush1.bf16.msra.mxu0 %v197
    %625 = vmatprep.subr.bf16.mxu0 %v202
    %626 = vmatpush1.bf16.msra.mxu0 %v201
    %627 = vmatprep.subr.bf16.mxu0 %v206
    %628 = vmatpush1.bf16.msra.mxu0 %v205
    %629 = vmatprep.subr.bf16.mxu0 %v210
    %630 = vmatpush1.bf16.msra.mxu0 %v209
    %631 = vmatprep.subr.bf16.mxu0 %v214
    %632 = vmatpush1.bf16.msra.mxu0 %v213
    %633 = vmatprep.subr.bf16.mxu0 %v218
    %634 = vmatpush1.bf16.msra.mxu0 %v217
    %635 = vmatprep.subr.bf16.mxu0 0
    %636 = vmatpush1.bf16.msra.mxu0 0
    %637 = vmatprep.subr.bf16.mxu0 0
    %638 = vmatpush1.bf16.msra.mxu0 0
    %639 = vmatprep.subr.bf16.mxu0 0
    %640 = vmatpush1.bf16.msra.mxu0 0
    %641 = vmatprep.subr.bf16.mxu0 0
    %642 = vmatpush1.bf16.msra.mxu0 0
    %643 = vmatprep.subr.bf16.mxu0 0
    %644 = vmatpush1.bf16.msra.mxu0 0
    %645 = vmatprep.subr.bf16.mxu0 0
    %646 = vmatpush1.bf16.msra.mxu0 0
    %647 = vmatprep.subr.bf16.mxu0 0
    %648 = vmatpush1.bf16.msra.mxu0 0
    %649 = vmatprep.subr.bf16.mxu0 0
    %650 = vmatpush1.bf16.msra.mxu0 0
    %651 = vmatprep.mubr.bf16.mxu0 0
    %652 = vmatmul.mubr.bf16.gmra.mrb[0].mxu0 %v618
    %v653 = vpop.f32.mrb[0].mxu0
    %v654 = vadd.f32 0.0, %v653
    %v655 = vpop.f32.mrb[0].mxu0
    %v656 = vadd.f32 0.0, %v655
    %v657 = vpop.f32.mrb[0].mxu0
    %v658 = vpop.f32.mrb[0].mxu0
    %659 = vdwg.mxu0
    %660 = vmatprep.subr.bf16.mxu0 %v192
    %661 = vmatpush1.bf16.msra.mxu0 %v191
    %662 = vmatprep.subr.bf16.mxu0 %v196
    %663 = vmatpush1.bf16.msra.mxu0 %v195
    %664 = vmatprep.subr.bf16.mxu0 %v200
    %665 = vmatpush1.bf16.msra.mxu0 %v199
    %666 = vmatprep.subr.bf16.mxu0 %v204
    %667 = vmatpush1.bf16.msra.mxu0 %v203
    %668 = vmatprep.subr.bf16.mxu0 %v208
    %669 = vmatpush1.bf16.msra.mxu0 %v207
    %670 = vmatprep.subr.bf16.mxu0 %v212
    %671 = vmatpush1.bf16.msra.mxu0 %v211
    %672 = vmatprep.subr.bf16.mxu0 %v216
    %673 = vmatpush1.bf16.msra.mxu0 %v215
    %674 = vmatprep.subr.bf16.mxu0 %v220
    %675 = vmatpush1.bf16.msra.mxu0 %v219
    %676 = vmatprep.subr.bf16.mxu0 0
    %677 = vmatpush1.bf16.msra.mxu0 0
    %678 = vmatprep.subr.bf16.mxu0 0
    %679 = vmatpush1.bf16.msra.mxu0 0
    %680 = vmatprep.subr.bf16.mxu0 0
    %681 = vmatpush1.bf16.msra.mxu0 0
    %682 = vmatprep.subr.bf16.mxu0 0
    %683 = vmatpush1.bf16.msra.mxu0 0
    %684 = vmatprep.subr.bf16.mxu0 0
    %685 = vmatpush1.bf16.msra.mxu0 0
    %686 = vmatprep.subr.bf16.mxu0 0
    %687 = vmatpush1.bf16.msra.mxu0 0
    %688 = vmatprep.subr.bf16.mxu0 0
    %689 = vmatpush1.bf16.msra.mxu0 0
    %690 = vmatprep.subr.bf16.mxu0 0
    %691 = vmatpush1.bf16.msra.mxu0 0
    %692 = vmatprep.mubr.bf16.mxu0 0
    %693 = vmatmul.mubr.bf16.gmra.mrb[0].mxu0 %v618
    %v694 = vpop.f32.mrb[0].mxu0
    %v695 = vadd.f32 0.0, %v694
    %v696 = vpop.f32.mrb[0].mxu0
    %v697 = vadd.f32 0.0, %v696
    %v698 = vpop.f32.mrb[0].mxu0
    %v699 = vpop.f32.mrb[0].mxu0
    %700 = vdwg.mxu0
    %v701 = vadd.f32 %v614, %v654
    %v702 = vadd.f32 %v615, %v656
    %v703 = vadd.f32 %v616, %v695
    %v704 = vadd.f32 %v617, %v697
    %v705 = vmul.f32 %v80, %v602
    %v706 = vmul.f32 %v84, %v602
    %v707 = vadd.f32 %v701, %v705
    %v708 = vadd.f32 %v702, %v706
    %v709 = vxor.u32 %v707, 2147483648
    %v710 = vxor.u32 %v708, 2147483648
    %v711 = vmul.f32 %v709, 1.442695
    %v712 = vpow.pop %v711
    %v713 = vmul.f32 %v710, 1.442695
    %v714 = vpow.pop %v713
    %v715 = vadd.f32 %v712, 1.0
    %v716 = vadd.f32 %v714, 1.0
    %v717 = vrcp.pop %v715
    %v718 = vmul.f32 1.0, %v717
    %v719 = vrcp.pop %v716
    %v720 = vmul.f32 1.0, %v719
    %v721 = vmul.f32 %v720, %v602
    %v722 = vtanh.pop %v703
    %v723 = vmul.f32 %v718, %v722
    %v724 = vadd.f32 %v721, %v723
    %v725 = vmul.f32 %v88, %v724
    %v726 = vadd.f32 %v704, %v725
    %v727 = vxor.u32 %v726, 2147483648
    %v728 = vmul.f32 %v727, 1.442695
    %v729 = vpow.pop %v728
    %v730 = vadd.f32 %v729, 1.0
    %v731 = vrcp.pop %v730
    %v732 = vmul.f32 1.0, %v731
    %v733 = vtanh.pop %v724
    %v734 = vmul.f32 %v732, %v733
    %s735 = scalar_lea.vmem [#allocation2], 128
    %v736 = vld [vmem:[%s735] sm:$0xff]
    %v737 = vld [vmem:[%s735 + $0x8] sm:$0xff]
    %v738 = vld [vmem:[%s735 + $0x10] sm:$0xff]
    %v739 = vld [vmem:[%s735 + $0x18] sm:$0xff]
    %v740 = vpack.c.bf16 %v734, %v734
    %741 = vmatprep.subr.bf16.mxu0 %v190
    %742 = vmatpush1.bf16.msra.mxu0 %v189
    %743 = vmatprep.subr.bf16.mxu0 %v194
    %744 = vmatpush1.bf16.msra.mxu0 %v193
    %745 = vmatprep.subr.bf16.mxu0 %v198
    %746 = vmatpush1.bf16.msra.mxu0 %v197
    %747 = vmatprep.subr.bf16.mxu0 %v202
    %748 = vmatpush1.bf16.msra.mxu0 %v201
    %749 = vmatprep.subr.bf16.mxu0 %v206
    %750 = vmatpush1.bf16.msra.mxu0 %v205
    %751 = vmatprep.subr.bf16.mxu0 %v210
    %752 = vmatpush1.bf16.msra.mxu0 %v209
    %753 = vmatprep.subr.bf16.mxu0 %v214
    %754 = vmatpush1.bf16.msra.mxu0 %v213
    %755 = vmatprep.subr.bf16.mxu0 %v218
    %756 = vmatpush1.bf16.msra.mxu0 %v217
    %757 = vmatprep.subr.bf16.mxu0 0
    %758 = vmatpush1.bf16.msra.mxu0 0
    %759 = vmatprep.subr.bf16.mxu0 0
    %760 = vmatpush1.bf16.msra.mxu0 0
    %761 = vmatprep.subr.bf16.mxu0 0
    %762 = vmatpush1.bf16.msra.mxu0 0
    %763 = vmatprep.subr.bf16.mxu0 0
    %764 = vmatpush1.bf16.msra.mxu0 0
    %765 = vmatprep.subr.bf16.mxu0 0
    %766 = vmatpush1.bf16.msra.mxu0 0
    %767 = vmatprep.subr.bf16.mxu0 0
    %768 = vmatpush1.bf16.msra.mxu0 0
    %769 = vmatprep.subr.bf16.mxu0 0
    %770 = vmatpush1.bf16.msra.mxu0 0
    %771 = vmatprep.subr.bf16.mxu0 0
    %772 = vmatpush1.bf16.msra.mxu0 0
    %773 = vmatprep.mubr.bf16.mxu0 0
    %774 = vmatmul.mubr.bf16.gmra.mrb[0].mxu0 %v740
    %v775 = vpop.f32.mrb[0].mxu0
    %v776 = vadd.f32 0.0, %v775
    %v777 = vpop.f32.mrb[0].mxu0
    %v778 = vadd.f32 0.0, %v777
    %v779 = vpop.f32.mrb[0].mxu0
    %v780 = vpop.f32.mrb[0].mxu0
    %781 = vdwg.mxu0
    %782 = vmatprep.subr.bf16.mxu0 %v192
    %783 = vmatpush1.bf16.msra.mxu0 %v191
    %784 = vmatprep.subr.bf16.mxu0 %v196
    %785 = vmatpush1.bf16.msra.mxu0 %v195
    %786 = vmatprep.subr.bf16.mxu0 %v200
    %787 = vmatpush1.bf16.msra.mxu0 %v199
    %788 = vmatprep.subr.bf16.mxu0 %v204
    %789 = vmatpush1.bf16.msra.mxu0 %v203
    %790 = vmatprep.subr.bf16.mxu0 %v208
    %791 = vmatpush1.bf16.msra.mxu0 %v207
    %792 = vmatprep.subr.bf16.mxu0 %v212
    %793 = vmatpush1.bf16.msra.mxu0 %v211
    %794 = vmatprep.subr.bf16.mxu0 %v216
    %795 = vmatpush1.bf16.msra.mxu0 %v215
    %796 = vmatprep.subr.bf16.mxu0 %v220
    %797 = vmatpush1.bf16.msra.mxu0 %v219
    %798 = vmatprep.subr.bf16.mxu0 0
    %799 = vmatpush1.bf16.msra.mxu0 0
    %800 = vmatprep.subr.bf16.mxu0 0
    %801 = vmatpush1.bf16.msra.mxu0 0
    %802 = vmatprep.subr.bf16.mxu0 0
    %803 = vmatpush1.bf16.msra.mxu0 0
    %804 = vmatprep.subr.bf16.mxu0 0
    %805 = vmatpush1.bf16.msra.mxu0 0
    %806 = vmatprep.subr.bf16.mxu0 0
    %807 = vmatpush1.bf16.msra.mxu0 0
    %808 = vmatprep.subr.bf16.mxu0 0
    %809 = vmatpush1.bf16.msra.mxu0 0
    %810 = vmatprep.subr.bf16.mxu0 0
    %811 = vmatpush1.bf16.msra.mxu0 0
    %812 = vmatprep.subr.bf16.mxu0 0
    %813 = vmatpush1.bf16.msra.mxu0 0
    %814 = vmatprep.mubr.bf16.mxu0 0
    %815 = vmatmul.mubr.bf16.gmra.mrb[0].mxu0 %v740
    %v816 = vpop.f32.mrb[0].mxu0
    %v817 = vadd.f32 0.0, %v816
    %v818 = vpop.f32.mrb[0].mxu0
    %v819 = vadd.f32 0.0, %v818
    %v820 = vpop.f32.mrb[0].mxu0
    %v821 = vpop.f32.mrb[0].mxu0
    %822 = vdwg.mxu0
    %v823 = vadd.f32 %v736, %v776
    %v824 = vadd.f32 %v737, %v778
    %v825 = vadd.f32 %v738, %v817
    %v826 = vadd.f32 %v739, %v819
    %v827 = vmul.f32 %v80, %v724
    %v828 = vmul.f32 %v84, %v724
    %v829 = vadd.f32 %v823, %v827
    %v830 = vadd.f32 %v824, %v828
    %v831 = vxor.u32 %v829, 2147483648
    %v832 = vxor.u32 %v830, 2147483648
    %v833 = vmul.f32 %v831, 1.442695
    %v834 = vpow.pop %v833
    %v835 = vmul.f32 %v832, 1.442695
    %v836 = vpow.pop %v835
    %v837 = vadd.f32 %v834, 1.0
    %v838 = vadd.f32 %v836, 1.0
    %v839 = vrcp.pop %v837
    %v840 = vmul.f32 1.0, %v839
    %v841 = vrcp.pop %v838
    %v842 = vmul.f32 1.0, %v841
    %v843 = vmul.f32 %v842, %v724
    %v844 = vtanh.pop %v825
    %v845 = vmul.f32 %v840, %v844
    %v846 = vadd.f32 %v843, %v845
    %v847 = vmul.f32 %v88, %v846
    %v848 = vadd.f32 %v826, %v847
    %v849 = vxor.u32 %v848, 2147483648
    %v850 = vmul.f32 %v849, 1.442695
    %v851 = vpow.pop %v850
    %v852 = vadd.f32 %v851, 1.0
    %v853 = vrcp.pop %v852
    %v854 = vmul.f32 1.0, %v853
    %v855 = vtanh.pop %v846
    %v856 = vmul.f32 %v854, %v855
    %s857 = scalar_lea.vmem [#allocation2], 160
    %v858 = vld [vmem:[%s857] sm:$0xff]
    %v859 = vld [vmem:[%s857 + $0x8] sm:$0xff]
    %v860 = vld [vmem:[%s857 + $0x10] sm:$0xff]
    %v861 = vld [vmem:[%s857 + $0x18] sm:$0xff]
    %v862 = vpack.c.bf16 %v856, %v856
    %863 = vmatprep.subr.bf16.mxu0 %v190
    %864 = vmatpush1.bf16.msra.mxu0 %v189
    %865 = vmatprep.subr.bf16.mxu0 %v194
    %866 = vmatpush1.bf16.msra.mxu0 %v193
    %867 = vmatprep.subr.bf16.mxu0 %v198
    %868 = vmatpush1.bf16.msra.mxu0 %v197
    %869 = vmatprep.subr.bf16.mxu0 %v202
    %870 = vmatpush1.bf16.msra.mxu0 %v201
    %871 = vmatprep.subr.bf16.mxu0 %v206
    %872 = vmatpush1.bf16.msra.mxu0 %v205
    %873 = vmatprep.subr.bf16.mxu0 %v210
    %874 = vmatpush1.bf16.msra.mxu0 %v209
    %875 = vmatprep.subr.bf16.mxu0 %v214
    %876 = vmatpush1.bf16.msra.mxu0 %v213
    %877 = vmatprep.subr.bf16.mxu0 %v218
    %878 = vmatpush1.bf16.msra.mxu0 %v217
    %879 = vmatprep.subr.bf16.mxu0 0
    %880 = vmatpush1.bf16.msra.mxu0 0
    %881 = vmatprep.subr.bf16.mxu0 0
    %882 = vmatpush1.bf16.msra.mxu0 0
    %883 = vmatprep.subr.bf16.mxu0 0
    %884 = vmatpush1.bf16.msra.mxu0 0
    %885 = vmatprep.subr.bf16.mxu0 0
    %886 = vmatpush1.bf16.msra.mxu0 0
    %887 = vmatprep.subr.bf16.mxu0 0
    %888 = vmatpush1.bf16.msra.mxu0 0
    %889 = vmatprep.subr.bf16.mxu0 0
    %890 = vmatpush1.bf16.msra.mxu0 0
    %891 = vmatprep.subr.bf16.mxu0 0
    %892 = vmatpush1.bf16.msra.mxu0 0
    %893 = vmatprep.subr.bf16.mxu0 0
    %894 = vmatpush1.bf16.msra.mxu0 0
    %895 = vmatprep.mubr.bf16.mxu0 0
    %896 = vmatmul.mubr.bf16.gmra.mrb[0].mxu0 %v862
    %v897 = vpop.f32.mrb[0].mxu0
    %v898 = vadd.f32 0.0, %v897
    %v899 = vpop.f32.mrb[0].mxu0
    %v900 = vadd.f32 0.0, %v899
    %v901 = vpop.f32.mrb[0].mxu0
    %v902 = vpop.f32.mrb[0].mxu0
    %903 = vdwg.mxu0
    %904 = vmatprep.subr.bf16.mxu0 %v192
    %905 = vmatpush1.bf16.msra.mxu0 %v191
    %906 = vmatprep.subr.bf16.mxu0 %v196
    %907 = vmatpush1.bf16.msra.mxu0 %v195
    %908 = vmatprep.subr.bf16.mxu0 %v200
    %909 = vmatpush1.bf16.msra.mxu0 %v199
    %910 = vmatprep.subr.bf16.mxu0 %v204
    %911 = vmatpush1.bf16.msra.mxu0 %v203
    %912 = vmatprep.subr.bf16.mxu0 %v208
    %913 = vmatpush1.bf16.msra.mxu0 %v207
    %914 = vmatprep.subr.bf16.mxu0 %v212
    %915 = vmatpush1.bf16.msra.mxu0 %v211
    %916 = vmatprep.subr.bf16.mxu0 %v216
    %917 = vmatpush1.bf16.msra.mxu0 %v215
    %918 = vmatprep.subr.bf16.mxu0 %v220
    %919 = vmatpush1.bf16.msra.mxu0 %v219
    %920 = vmatprep.subr.bf16.mxu0 0
    %921 = vmatpush1.bf16.msra.mxu0 0
    %922 = vmatprep.subr.bf16.mxu0 0
    %923 = vmatpush1.bf16.msra.mxu0 0
    %924 = vmatprep.subr.bf16.mxu0 0
    %925 = vmatpush1.bf16.msra.mxu0 0
    %926 = vmatprep.subr.bf16.mxu0 0
    %927 = vmatpush1.bf16.msra.mxu0 0
    %928 = vmatprep.subr.bf16.mxu0 0
    %929 = vmatpush1.bf16.msra.mxu0 0
    %930 = vmatprep.subr.bf16.mxu0 0
    %931 = vmatpush1.bf16.msra.mxu0 0
    %932 = vmatprep.subr.bf16.mxu0 0
    %933 = vmatpush1.bf16.msra.mxu0 0
    %934 = vmatprep.subr.bf16.mxu0 0
    %935 = vmatpush1.bf16.msra.mxu0 0
    %936 = vmatprep.mubr.bf16.mxu0 0
    %937 = vmatmul.mubr.bf16.gmra.mrb[0].mxu0 %v862
    %v938 = vpop.f32.mrb[0].mxu0
    %v939 = vadd.f32 0.0, %v938
    %v940 = vpop.f32.mrb[0].mxu0
    %v941 = vadd.f32 0.0, %v940
    %v942 = vpop.f32.mrb[0].mxu0
    %v943 = vpop.f32.mrb[0].mxu0
    %944 = vdwg.mxu0
    %v945 = vadd.f32 %v858, %v898
    %v946 = vadd.f32 %v859, %v900
    %v947 = vadd.f32 %v860, %v939
    %v948 = vadd.f32 %v861, %v941
    %v949 = vmul.f32 %v80, %v846
    %v950 = vmul.f32 %v84, %v846
    %v951 = vadd.f32 %v945, %v949
    %v952 = vadd.f32 %v946, %v950
    %v953 = vxor.u32 %v951, 2147483648
    %v954 = vxor.u32 %v952, 2147483648
    %v955 = vmul.f32 %v953, 1.442695
    %v956 = vpow.pop %v955
    %v957 = vmul.f32 %v954, 1.442695
    %v958 = vpow.pop %v957
    %v959 = vadd.f32 %v956, 1.0
    %v960 = vadd.f32 %v958, 1.0
    %v961 = vrcp.pop %v959
    %v962 = vmul.f32 1.0, %v961
    %v963 = vrcp.pop %v960
    %v964 = vmul.f32 1.0, %v963
    %v965 = vmul.f32 %v964, %v846
    %v966 = vtanh.pop %v947
    %v967 = vmul.f32 %v962, %v966
    %v968 = vadd.f32 %v965, %v967
    %v969 = vmul.f32 %v88, %v968
    %v970 = vadd.f32 %v948, %v969
    %v971 = vxor.u32 %v970, 2147483648
    %v972 = vmul.f32 %v971, 1.442695
    %v973 = vpow.pop %v972
    %v974 = vadd.f32 %v973, 1.0
    %v975 = vrcp.pop %v974
    %v976 = vmul.f32 1.0, %v975
    %v977 = vtanh.pop %v968
    %v978 = vmul.f32 %v976, %v977
    %s979 = scalar_lea.vmem [#allocation2], 192
    %v980 = vld [vmem:[%s979] sm:$0xff]
    %v981 = vld [vmem:[%s979 + $0x8] sm:$0xff]
    %v982 = vld [vmem:[%s979 + $0x10] sm:$0xff]
    %v983 = vld [vmem:[%s979 + $0x18] sm:$0xff]
    %v984 = vpack.c.bf16 %v978, %v978
    %985 = vmatprep.subr.bf16.mxu0 %v190
    %986 = vmatpush1.bf16.msra.mxu0 %v189
    %987 = vmatprep.subr.bf16.mxu0 %v194
    %988 = vmatpush1.bf16.msra.mxu0 %v193
    %989 = vmatprep.subr.bf16.mxu0 %v198
    %990 = vmatpush1.bf16.msra.mxu0 %v197
    %991 = vmatprep.subr.bf16.mxu0 %v202
    %992 = vmatpush1.bf16.msra.mxu0 %v201
    %993 = vmatprep.subr.bf16.mxu0 %v206
    %994 = vmatpush1.bf16.msra.mxu0 %v205
    %995 = vmatprep.subr.bf16.mxu0 %v210
    %996 = vmatpush1.bf16.msra.mxu0 %v209
    %997 = vmatprep.subr.bf16.mxu0 %v214
    %998 = vmatpush1.bf16.msra.mxu0 %v213
    %999 = vmatprep.subr.bf16.mxu0 %v218
    %1000 = vmatpush1.bf16.msra.mxu0 %v217
    %1001 = vmatprep.subr.bf16.mxu0 0
    %1002 = vmatpush1.bf16.msra.mxu0 0
    %1003 = vmatprep.subr.bf16.mxu0 0
    %1004 = vmatpush1.bf16.msra.mxu0 0
    %1005 = vmatprep.subr.bf16.mxu0 0
    %1006 = vmatpush1.bf16.msra.mxu0 0
    %1007 = vmatprep.subr.bf16.mxu0 0
    %1008 = vmatpush1.bf16.msra.mxu0 0
    %1009 = vmatprep.subr.bf16.mxu0 0
    %1010 = vmatpush1.bf16.msra.mxu0 0
    %1011 = vmatprep.subr.bf16.mxu0 0
    %1012 = vmatpush1.bf16.msra.mxu0 0
    %1013 = vmatprep.subr.bf16.mxu0 0
    %1014 = vmatpush1.bf16.msra.mxu0 0
    %1015 = vmatprep.subr.bf16.mxu0 0
    %1016 = vmatpush1.bf16.msra.mxu0 0
    %1017 = vmatprep.mubr.bf16.mxu0 0
    %1018 = vmatmul.mubr.bf16.gmra.mrb[0].mxu0 %v984
    %v1019 = vpop.f32.mrb[0].mxu0
    %v1020 = vadd.f32 0.0, %v1019
    %v1021 = vpop.f32.mrb[0].mxu0
    %v1022 = vadd.f32 0.0, %v1021
    %v1023 = vpop.f32.mrb[0].mxu0
    %v1024 = vpop.f32.mrb[0].mxu0
    %1025 = vdwg.mxu0
    %1026 = vmatprep.subr.bf16.mxu0 %v192
    %1027 = vmatpush1.bf16.msra.mxu0 %v191
    %1028 = vmatprep.subr.bf16.mxu0 %v196
    %1029 = vmatpush1.bf16.msra.mxu0 %v195
    %1030 = vmatprep.subr.bf16.mxu0 %v200
    %1031 = vmatpush1.bf16.msra.mxu0 %v199
    %1032 = vmatprep.subr.bf16.mxu0 %v204
    %1033 = vmatpush1.bf16.msra.mxu0 %v203
    %1034 = vmatprep.subr.bf16.mxu0 %v208
    %1035 = vmatpush1.bf16.msra.mxu0 %v207
    %1036 = vmatprep.subr.bf16.mxu0 %v212
    %1037 = vmatpush1.bf16.msra.mxu0 %v211
    %1038 = vmatprep.subr.bf16.mxu0 %v216
    %1039 = vmatpush1.bf16.msra.mxu0 %v215
    %1040 = vmatprep.subr.bf16.mxu0 %v220
    %1041 = vmatpush1.bf16.msra.mxu0 %v219
    %1042 = vmatprep.subr.bf16.mxu0 0
    %1043 = vmatpush1.bf16.msra.mxu0 0
    %1044 = vmatprep.subr.bf16.mxu0 0
    %1045 = vmatpush1.bf16.msra.mxu0 0
    %1046 = vmatprep.subr.bf16.mxu0 0
    %1047 = vmatpush1.bf16.msra.mxu0 0
    %1048 = vmatprep.subr.bf16.mxu0 0
    %1049 = vmatpush1.bf16.msra.mxu0 0
    %1050 = vmatprep.subr.bf16.mxu0 0
    %1051 = vmatpush1.bf16.msra.mxu0 0
    %1052 = vmatprep.subr.bf16.mxu0 0
    %1053 = vmatpush1.bf16.msra.mxu0 0
    %1054 = vmatprep.subr.bf16.mxu0 0
    %1055 = vmatpush1.bf16.msra.mxu0 0
    %1056 = vmatprep.subr.bf16.mxu0 0
    %1057 = vmatpush1.bf16.msra.mxu0 0
    %1058 = vmatprep.mubr.bf16.mxu0 0
    %1059 = vmatmul.mubr.bf16.gmra.mrb[0].mxu0 %v984
    %v1060 = vpop.f32.mrb[0].mxu0
    %v1061 = vadd.f32 0.0, %v1060
    %v1062 = vpop.f32.mrb[0].mxu0
    %v1063 = vadd.f32 0.0, %v1062
    %v1064 = vpop.f32.mrb[0].mxu0
    %v1065 = vpop.f32.mrb[0].mxu0
    %1066 = vdwg.mxu0
    %v1067 = vadd.f32 %v980, %v1020
    %v1068 = vadd.f32 %v981, %v1022
    %v1069 = vadd.f32 %v982, %v1061
    %v1070 = vadd.f32 %v983, %v1063
    %v1071 = vmul.f32 %v80, %v968
    %v1072 = vmul.f32 %v84, %v968
    %v1073 = vadd.f32 %v1067, %v1071
    %v1074 = vadd.f32 %v1068, %v1072
    %v1075 = vxor.u32 %v1073, 2147483648
    %v1076 = vxor.u32 %v1074, 2147483648
    %v1077 = vmul.f32 %v1075, 1.442695
    %v1078 = vpow.pop %v1077
    %v1079 = vmul.f32 %v1076, 1.442695
    %v1080 = vpow.pop %v1079
    %v1081 = vadd.f32 %v1078, 1.0
    %v1082 = vadd.f32 %v1080, 1.0
    %v1083 = vrcp.pop %v1081
    %v1084 = vmul.f32 1.0, %v1083
    %v1085 = vrcp.pop %v1082
    %v1086 = vmul.f32 1.0, %v1085
    %v1087 = vmul.f32 %v1086, %v968
    %v1088 = vtanh.pop %v1069
    %v1089 = vmul.f32 %v1084, %v1088
    %v1090 = vadd.f32 %v1087, %v1089
    %v1091 = vmul.f32 %v88, %v1090
    %v1092 = vadd.f32 %v1070, %v1091
    %v1093 = vxor.u32 %v1092, 2147483648
    %v1094 = vmul.f32 %v1093, 1.442695
    %v1095 = vpow.pop %v1094
    %v1096 = vadd.f32 %v1095, 1.0
    %v1097 = vrcp.pop %v1096
    %v1098 = vmul.f32 1.0, %v1097
    %v1099 = vtanh.pop %v1090
    %v1100 = vmul.f32 %v1098, %v1099
    %s1101 = scalar_lea.vmem [#allocation2], 224
    %v1102 = vld [vmem:[%s1101] sm:$0xff]
    %v1103 = vld [vmem:[%s1101 + $0x8] sm:$0xff]
    %v1104 = vld [vmem:[%s1101 + $0x10] sm:$0xff]
    %v1105 = vld [vmem:[%s1101 + $0x18] sm:$0xff]
    %v1106 = vpack.c.bf16 %v1100, %v1100
    %1107 = vmatprep.subr.bf16.mxu0 %v190
    %1108 = vmatpush1.bf16.msra.mxu0 %v189
    %1109 = vmatprep.subr.bf16.mxu0 %v194
    %1110 = vmatpush1.bf16.msra.mxu0 %v193
    %1111 = vmatprep.subr.bf16.mxu0 %v198
    %1112 = vmatpush1.bf16.msra.mxu0 %v197
    %1113 = vmatprep.subr.bf16.mxu0 %v202
    %1114 = vmatpush1.bf16.msra.mxu0 %v201
    %1115 = vmatprep.subr.bf16.mxu0 %v206
    %1116 = vmatpush1.bf16.msra.mxu0 %v205
    %1117 = vmatprep.subr.bf16.mxu0 %v210
    %1118 = vmatpush1.bf16.msra.mxu0 %v209
    %1119 = vmatprep.subr.bf16.mxu0 %v214
    %1120 = vmatpush1.bf16.msra.mxu0 %v213
    %1121 = vmatprep.subr.bf16.mxu0 %v218
    %1122 = vmatpush1.bf16.msra.mxu0 %v217
    %1123 = vmatprep.subr.bf16.mxu0 0
    %1124 = vmatpush1.bf16.msra.mxu0 0
    %1125 = vmatprep.subr.bf16.mxu0 0
    %1126 = vmatpush1.bf16.msra.mxu0 0
    %1127 = vmatprep.subr.bf16.mxu0 0
    %1128 = vmatpush1.bf16.msra.mxu0 0
    %1129 = vmatprep.subr.bf16.mxu0 0
    %1130 = vmatpush1.bf16.msra.mxu0 0
    %1131 = vmatprep.subr.bf16.mxu0 0
    %1132 = vmatpush1.bf16.msra.mxu0 0
    %1133 = vmatprep.subr.bf16.mxu0 0
    %1134 = vmatpush1.bf16.msra.mxu0 0
    %1135 = vmatprep.subr.bf16.mxu0 0
    %1136 = vmatpush1.bf16.msra.mxu0 0
    %1137 = vmatprep.subr.bf16.mxu0 0
    %1138 = vmatpush1.bf16.msra.mxu0 0
    %1139 = vmatprep.mubr.bf16.mxu0 0
    %1140 = vmatmul.mubr.bf16.gmra.mrb[0].mxu0 %v1106
    %v1141 = vpop.f32.mrb[0].mxu0
    %v1142 = vadd.f32 0.0, %v1141
    %v1143 = vpop.f32.mrb[0].mxu0
    %v1144 = vadd.f32 0.0, %v1143
    %v1145 = vpop.f32.mrb[0].mxu0
    %v1146 = vpop.f32.mrb[0].mxu0
    %1147 = vdwg.mxu0
    %1148 = vmatprep.subr.bf16.mxu0 %v192
    %1149 = vmatpush1.bf16.msra.mxu0 %v191
    %1150 = vmatprep.subr.bf16.mxu0 %v196
    %1151 = vmatpush1.bf16.msra.mxu0 %v195
    %1152 = vmatprep.subr.bf16.mxu0 %v200
    %1153 = vmatpush1.bf16.msra.mxu0 %v199
    %1154 = vmatprep.subr.bf16.mxu0 %v204
    %1155 = vmatpush1.bf16.msra.mxu0 %v203
    %1156 = vmatprep.subr.bf16.mxu0 %v208
    %1157 = vmatpush1.bf16.msra.mxu0 %v207
    %1158 = vmatprep.subr.bf16.mxu0 %v212
    %1159 = vmatpush1.bf16.msra.mxu0 %v211
    %1160 = vmatprep.subr.bf16.mxu0 %v216
    %1161 = vmatpush1.bf16.msra.mxu0 %v215
    %1162 = vmatprep.subr.bf16.mxu0 %v220
    %1163 = vmatpush1.bf16.msra.mxu0 %v219
    %1164 = vmatprep.subr.bf16.mxu0 0
    %1165 = vmatpush1.bf16.msra.mxu0 0
    %1166 = vmatprep.subr.bf16.mxu0 0
    %1167 = vmatpush1.bf16.msra.mxu0 0
    %1168 = vmatprep.subr.bf16.mxu0 0
    %1169 = vmatpush1.bf16.msra.mxu0 0
    %1170 = vmatprep.subr.bf16.mxu0 0
    %1171 = vmatpush1.bf16.msra.mxu0 0
    %1172 = vmatprep.subr.bf16.mxu0 0
    %1173 = vmatpush1.bf16.msra.mxu0 0
    %1174 = vmatprep.subr.bf16.mxu0 0
    %1175 = vmatpush1.bf16.msra.mxu0 0
    %1176 = vmatprep.subr.bf16.mxu0 0
    %1177 = vmatpush1.bf16.msra.mxu0 0
    %1178 = vmatprep.subr.bf16.mxu0 0
    %1179 = vmatpush1.bf16.msra.mxu0 0
    %1180 = vmatprep.mubr.bf16.mxu0 0
    %1181 = vmatmul.mubr.bf16.gmra.mrb[0].mxu0 %v1106
    %v1182 = vpop.f32.mrb[0].mxu0
    %v1183 = vadd.f32 0.0, %v1182
    %v1184 = vpop.f32.mrb[0].mxu0
    %v1185 = vadd.f32 0.0, %v1184
    %v1186 = vpop.f32.mrb[0].mxu0
    %v1187 = vpop.f32.mrb[0].mxu0
    %1188 = vdwg.mxu0
    %v1189 = vadd.f32 %v1102, %v1142
    %v1190 = vadd.f32 %v1103, %v1144
    %v1191 = vadd.f32 %v1104, %v1183
    %v1192 = vadd.f32 %v1105, %v1185
    %v1193 = vmul.f32 %v80, %v1090
    %v1194 = vmul.f32 %v84, %v1090
    %v1195 = vadd.f32 %v1189, %v1193
    %v1196 = vadd.f32 %v1190, %v1194
    %v1197 = vxor.u32 %v1195, 2147483648
    %v1198 = vxor.u32 %v1196, 2147483648
    %v1199 = vmul.f32 %v1197, 1.442695
    %v1200 = vpow.pop %v1199
    %v1201 = vmul.f32 %v1198, 1.442695
    %v1202 = vpow.pop %v1201
    %v1203 = vadd.f32 %v1200, 1.0
    %v1204 = vadd.f32 %v1202, 1.0
    %v1205 = vrcp.pop %v1203
    %v1206 = vmul.f32 1.0, %v1205
    %v1207 = vrcp.pop %v1204
    %v1208 = vmul.f32 1.0, %v1207
    %v1209 = vmul.f32 %v1208, %v1090
    %v1210 = vtanh.pop %v1191
    %v1211 = vmul.f32 %v1206, %v1210
    %v1212 = vadd.f32 %v1209, %v1211
    %v1213 = vmul.f32 %v88, %v1212
    %v1214 = vadd.f32 %v1192, %v1213
    %v1215 = vxor.u32 %v1214, 2147483648
    %v1216 = vmul.f32 %v1215, 1.442695
    %v1217 = vpow.pop %v1216
    %v1218 = vadd.f32 %v1217, 1.0
    %v1219 = vrcp.pop %v1218
    %v1220 = vmul.f32 1.0, %v1219
    %v1221 = vtanh.pop %v1212
    %v1222 = vmul.f32 %v1220, %v1221
    %1223 = vst [vmem:[#allocation7] sm:$0xff] %v1222
    // Predicated region
    $region22: #{tpu_custom_call.1} parent=1 // pred_check
      _
    $region23: #{tpu_custom_call.1} parent=1 // pred_check_branch
      %1225 = sbr.rel (0) target = $region25
    $region24: #{tpu_custom_call.1} parent=1 // pred_region
      %s1227 = ssub.s32 128, 128
      %1228 = vsyncadd [#allocation4], %s1227
      %s1230 = sshll.u32 [#allocation7], 4
      %s1231 = int_to_ptr.vmem [resolvable:$true] %s1230
      %1233 = dma.vmem_to_hbm [thread:$0]  %s1231, 128, %s3, [#allocation4]
    $region25: #{tpu_custom_call.1} parent=1 // pred_fallthru
      _
    // Predicated region
    $region26: #{tpu_custom_call.1} parent=1 // pred_check
      _
    $region27: #{tpu_custom_call.1} parent=1 // pred_check_branch
      %1235 = sbr.rel (0) target = $region29
    $region28: #{tpu_custom_call.1} parent=1 // pred_region
      %1236 = dma.done [#allocation4], 128
    $region29: #{tpu_custom_call.1} parent=1 // pred_fallthru
      _
    %1237 = vsyncpa [#allocation3], 1
    %1238 = vsyncpa [#allocation6], 1
    %1239 = vsyncpa [#allocation4], 1

</llo_original>
